<compile_context>
chip_gen: v7x
topology: tpu7x:2x2x1
jax: 0.10.0
libtpu: 0.0.40
codegen_flags: <defaults>
</compile_context>

<pallas_src>
import functools

import numpy as np
import jax
import jax.numpy as jnp
from jax.experimental import pallas as pl
from jax.experimental.pallas import tpu as pltpu


def _const_specs(arrays):
    """Full-array VMEM BlockSpecs (same block at every grid step)."""
    specs = []
    for arr in arrays:
        nd = arr.ndim
        specs.append(pl.BlockSpec(arr.shape, lambda g, _z=(0,) * nd: _z))
    return specs


def _pick_batch_block(n, lanes_per_sample, max_lanes=512):
    """Largest divisor of n whose folded lane width stays modest.

    Folding Nb samples into the lane axis amortises the ~0.35us/step grid
    overhead and fills the 128-lane vregs.  Nb is capped because the
    block-diagonal adjacency grows quadratically in Nb (v7x has only 64 MiB
    physical VMEM).  On v7x a grid length that is a multiple of 2 keeps both
    TensorCores busy; at these tiny sizes we simply minimise grid steps.
    """
    nb = 1
    for d in range(1, n + 1):
        if n % d == 0 and d * lanes_per_sample <= max(max_lanes,
                                                      lanes_per_sample):
            nb = d
    return nb


# ----------------------------------------------------------------------------
# Fused st_gcn stack:
#   per layer: gcn (1x1 conv + block-diag adjacency matmul) -> BN -> PReLU
#              -> temporal (K,1) conv (one im2col dot) -> BN -> (+ residual)
#              -> PReLU
# Activation layout: (C, Nb*TVp)  -- per-sample temporally padded, batch-major
# lanes; garbage may live in pad columns but is annihilated by the adjacency
# matrix' zero rows and masked out before the temporal-conv taps.
# ----------------------------------------------------------------------------
def _make_stgcn_kernel(modes, n_mats, C, K, T, V, pad, Nb):
    TV = T * V
    pV = pad * V
    TVp = TV + 2 * pV
    L = Nb * TVp

    def kernel(*refs):
        x_ref, a2b_ref, valid_ref = refs[:3]
        pos = 3
        layer_mats = []
        for nm in n_mats:
            layer_mats.append(refs[pos:pos + nm])
            pos += nm
        vecs_ref, out_ref = refs[pos], refs[pos + 1]
        xs_scr, zp_scr = refs[pos + 2], refs[pos + 3]

        a2b = a2b_ref[...]            # (L, L) block-diag adjacency (padded)
        valid = valid_ref[...]        # (1, L) 1/0 mask of non-pad columns
        vecs = vecs_ref[...]          # (C, n_vecs) packed shifts / slopes

        # assemble the layer-0 input slab (per-sample temporal zero padding)
        xs_scr[...] = jnp.zeros(xs_scr.shape, jnp.float32)
        for n in range(Nb):
            xs_scr[:, n * TVp + pV:n * TVp + pV + TV] = x_ref[n]
        x = xs_scr[...]               # (Cin0, L)

        # zero only the tap margins of the im2col slab; the interior is fully
        # rewritten every layer.  Re-done each step (megacore-safe, tiny).
        zmargin = jnp.zeros((C, pV), jnp.float32)
        zp_scr[:, 0:pV] = zmargin
        zp_scr[:, pV + L:pV + L + pV] = zmargin

        col = [0]

        def take():
            c = vecs[:, col[0]:col[0] + 1]
            col[0] += 1
            return c

        for mode, mats in zip(modes, layer_mats):
            wg = mats[0][...]         # (C, Cin)  BN1 scale folded in
            wt = mats[1][...]         # (C, K*C)  BN2 scale folded in
            bg1, h1, sh2, a1, ao = take(), take(), take(), take(), take()

            # gcn: 1x1 conv + block-diagonal adjacency contraction (2 dots)
            y = jnp.dot(wg, x, preferred_element_type=jnp.float32) + bg1
            z = jnp.dot(y, a2b, preferred_element_type=jnp.float32) + h1
            # tcn PReLU; zero pad columns so the shifted taps see real zeros
            z = jnp.where(z >= 0.0, z, a1 * z) * valid

            # temporal (K,1) conv as ONE im2col dot (contraction K*C)
            zp_scr[:, pV:pV + L] = z
            taps = jnp.concatenate(
                [zp_scr[:, k * V:k * V + L] for k in range(K)], axis=0)
            h = jnp.dot(wt, taps, preferred_element_type=jnp.float32) + sh2

            if mode == "identity":
                h = h + x
            else:                     # 1x1 conv residual, BN folded
                wr = mats[2][...]
                shr = take()
                h = h + jnp.dot(wr, x,
                                preferred_element_type=jnp.float32) + shr

            x = jnp.where(h >= 0.0, h, ao * h)   # outer PReLU (use_mdn=False)

        # store the valid (unpadded) columns, one (C, T*V) slab per sample
        for n in range(Nb):
            out_ref[n] = x[:, n * TVp + pV:n * TVp + pV + TV]

    return kernel


def stgcn_stack(v, a, layers, Nb):
    """v: (N, Cin0, T, V); a: (T, V, V).  Returns (N, C, T*V)."""
    N, Cin0, T, V = v.shape
    C = layers[0]["wg"].shape[0]
    K = layers[0]["wt"].shape[0]
    pad = (K - 1) // 2
    pV = pad * V
    TV = T * V
    TVp = TV + 2 * pV
    L = Nb * TVp
    G = N // Nb

    x = v.reshape(N, Cin0, TV)        # free row-major reshape, no transpose

    # Block-diagonal adjacency in per-sample temporally padded coordinates;
    # zero pad rows/cols give the temporal zero padding for free and kill any
    # garbage living in pad columns of the activation.
    a_core = jnp.einsum("tvw,ts->tvsw", a,
                        jnp.eye(T, dtype=a.dtype)).reshape(TV, TV)
    a_pad = jnp.pad(a_core, ((pV, pV), (pV, pV)))
    # NOTE: quadratic in Nb -- _pick_batch_block keeps Nb modest (v7x: 64 MiB).
    a2b = jnp.kron(jnp.eye(Nb, dtype=a_pad.dtype), a_pad)       # (L, L)

    valid = np.zeros((1, TVp), np.float32)
    valid[:, pV:pV + TV] = 1.0
    valid = jnp.asarray(np.tile(valid, (1, Nb)))                # (1, L)

    modes, n_mats, mats, cols = [], [], [], []
    for p in layers:
        modes.append(p["res_mode"])
        s1, s2 = p["s1"], p["s2"]
        wg1 = p["wg"] * s1                                      # fold BN1 scale
        bg1 = p["bg"] * s1
        wt2 = jnp.transpose(p["wt"], (1, 0, 2)).reshape(C, K * C) * s2
        sh2 = p["bt"] * s2 + p["h2"]                            # bias + BN2
        a1 = jnp.broadcast_to(p["a1"].reshape(1, 1), (C, 1))
        ao = jnp.broadcast_to(p["ao"].reshape(1, 1), (C, 1))
        layer_mats = [wg1, wt2]
        layer_cols = [bg1, p["h1"], sh2, a1, ao]
        if p["res_mode"] == "conv":
            layer_mats.append(p["wr"] * p["sr"])
            layer_cols.append(p["br"] * p["sr"] + p["hr"])
        n_mats.append(len(layer_mats))
        mats += layer_mats
        cols += layer_cols
    vecs = jnp.concatenate(cols, axis=1)                        # (C, n_vecs)

    consts = [a2b, valid] + mats + [vecs]
    in_specs = ([pl.BlockSpec((Nb, Cin0, TV), lambda g: (g, 0, 0))]
                + _const_specs(consts))

    return pl.pallas_call(
        _make_stgcn_kernel(tuple(modes), tuple(n_mats), C, K, T, V, pad, Nb),
        grid=(G,),
        in_specs=in_specs,
        out_specs=pl.BlockSpec((Nb, C, TV), lambda g: (g, 0, 0)),
        out_shape=jax.ShapeDtypeStruct((N, C, TV), jnp.float32),
        scratch_shapes=[pltpu.VMEM((Cin0, L), jnp.float32),
                        pltpu.VMEM((C, L + 2 * pV), jnp.float32)],
        compiler_params=pltpu.CompilerParams(
            dimension_semantics=("parallel",)),
    )(x, *consts)


# ----------------------------------------------------------------------------
# Fused tx-cnn stack: 3x3 Conv2d (padding=1) layers with PReLU / residuals.
# Activations live in a padded-flat (Cch, Nb*Hp*Wp) layout (zero image borders,
# small zero side margins in a VMEM slab) so every 3x3 conv is ONE im2col dot.
# The input padding and the final interior crop are tiny in-kernel matmuls.
# ----------------------------------------------------------------------------
def _make_tpcnn_kernel(n_mid, K, H, W, T, P, Nb):
    Hp, Wp = H + 2, W + 2
    HWp = Hp * Wp
    Lc = Nb * HWp
    Mg = Wp + 1                  # side margin: every tap slice stays in bounds

    def kernel(*refs):
        x_ref, s_ref, st_ref, int_ref = refs[:4]
        w_refs = refs[4:5 + n_mid]
        vecs_ref = refs[5 + n_mid]
        out_ref = refs[6 + n_mid]
        slab = refs[7 + n_mid]          # VMEM scratch (max(T,P), Lc + 2*Mg)

        s_mat = s_ref[...]              # (H*W, HWp) interior scatter
        st_mat = st_ref[...]            # (HWp, H*W) interior gather (crop)
        interior = int_ref[...]         # (1, Lc) 1/0 mask
        vecs = vecs_ref[...]            # (P, n_vecs) packed biases / slopes

        rows = slab.shape[0]
        zmargin = jnp.zeros((rows, Mg), jnp.float32)
        slab[:, 0:Mg] = zmargin
        slab[:, Mg + Lc:Mg + Lc + Mg] = zmargin

        col = [0]

        def take():
            c = vecs[:, col[0]:col[0] + 1]
            col[0] += 1
            return c

        def conv3x3(cin, w):
            # 3x3 conv as ONE im2col dot over 9 shifted slices of the slab
            taps = jnp.concatenate(
                [slab[0:cin, di * Wp + dj:di * Wp + dj + Lc]
                 for di in range(K) for dj in range(K)], axis=0)
            return jnp.dot(w, taps, preferred_element_type=jnp.float32)

        # scatter each sample's (T, C*V) block into the interior of its padded
        # (Hp, Wp) image: one small matmul per sample, borders come out zero.
        for n in range(Nb):
            slab[0:T, Mg + n * HWp:Mg + (n + 1) * HWp] = jnp.dot(
                x_ref[n], s_mat, preferred_element_type=jnp.float32)

        # layer 0: conv -> PReLU (no residual in the reference forward)
        b0, a0 = take(), take()
        y = conv3x3(T, w_refs[0][...]) + b0
        cur = jnp.where(y >= 0.0, y, a0 * y) * interior

        # middle layers: conv -> PReLU -> + residual
        for li in range(1, n_mid):
            b, al = take(), take()
            slab[0:P, Mg:Mg + Lc] = cur
            y = conv3x3(P, w_refs[li][...]) + b
            y = jnp.where(y >= 0.0, y, al * y) * interior
            cur = cur + y

        # output conv, then crop each sample's interior with one small matmul
        bo = take()
        slab[0:P, Mg:Mg + Lc] = cur
        y = conv3x3(P, w_refs[n_mid][...]) + bo        # (P, Lc)
        for n in range(Nb):
            out_ref[n] = jnp.dot(y[:, n * HWp:(n + 1) * HWp], st_mat,
                                 preferred_element_type=jnp.float32)

    return kernel


def tpcnn_stack(u, convs, alphas, H, W, Nb):
    """u: (N, T, H*W) flat `.view` of the st_gcn output.  Returns (N, P, H*W)."""
    N, T, HW = u.shape
    P, K = convs[0][0].shape[0], convs[0][0].shape[2]
    assert K == 3, "tx-cnn hard-codes padding=1; kernel_size must be 3"
    Hp, Wp = H + 2, W + 2
    HWp = Hp * Wp
    Lc = Nb * HWp
    Mg = Wp + 1
    G = N // Nb
    n_mid = len(convs) - 1

    # 0/1 scatter placing an (H, W) interior into a zero-bordered (Hp, Wp)
    # padded-flat image; its transpose crops the interior back out.
    s_np = np.zeros((H * W, HWp), np.float32)
    for i in range(H):
        for j in range(W):
            s_np[i * W + j, (i + 1) * Wp + (j + 1)] = 1.0
    s_mat, st_mat = jnp.asarray(s_np), jnp.asarray(s_np.T)

    m = np.zeros((Hp, Wp), np.float32)
    m[1:1 + H, 1:1 + W] = 1.0
    interior = jnp.asarray(np.tile(m.reshape(1, HWp), (1, Nb)))   # (1, Lc)

    w_flats, cols = [], []
    for li, (w, b) in enumerate(convs):
        cin = w.shape[1]
        w_flats.append(jnp.transpose(w, (0, 2, 3, 1)).reshape(P, K * K * cin))
        cols.append(b.reshape(P, 1))
        if li < n_mid:
            cols.append(jnp.broadcast_to(alphas[li].reshape(1, 1), (P, 1)))
    vecs = jnp.concatenate(cols, axis=1)                          # (P, n_vecs)

    consts = [s_mat, st_mat, interior] + w_flats + [vecs]
    in_specs = ([pl.BlockSpec((Nb, T, HW), lambda g: (g, 0, 0))]
                + _const_specs(consts))

    return pl.pallas_call(
        _make_tpcnn_kernel(n_mid, K, H, W, T, P, Nb),
        grid=(G,),
        in_specs=in_specs,
        out_specs=pl.BlockSpec((Nb, P, HW), lambda g: (g, 0, 0)),
        out_shape=jax.ShapeDtypeStruct((N, P, HW), jnp.float32),
        scratch_shapes=[pltpu.VMEM((max(T, P), Lc + 2 * Mg), jnp.float32)],
        compiler_params=pltpu.CompilerParams(
            dimension_semantics=("parallel",)),
    )(u, *consts)


# ----------------------------------------------------------------------------
# Full social_stgcnn forward
# ----------------------------------------------------------------------------
def social_stgcnn_forward(v, a, params):
    N, Cin0, T, V = v.shape
    st_layers = params["st_gcns"]
    C = st_layers[0]["wg"].shape[0]          # output_feat
    K = st_layers[0]["wt"].shape[0]
    pad = (K - 1) // 2
    P = params["tpcnn_output"]["w"].shape[0]

    # ---- fused st_gcn stack (one pallas_call, batch folded into lanes) ----
    Nb = _pick_batch_block(N, (T + 2 * pad) * V)
    h = stgcn_stack(v, a, st_layers, Nb)                  # (N, C, T*V)

    # torch `.view(N, T, C, V)`: a pure row-major reinterpretation (free)
    u = h.reshape(N, T, C * V)

    # ---- fused tx-cnn stack (padding / crop done in-kernel) ----
    n_txpcnn = params["n_txpcnn"]
    # The reference forward only uses tpcnns[0 .. n_txpcnn-2] (+ prelus)
    # before tpcnn_output -- mirror that exactly.
    n_mid = max(1, n_txpcnn - 1)
    convs = [(params["tpcnns"][k]["w"], params["tpcnns"][k]["b"])
             for k in range(n_mid)]
    convs.append((params["tpcnn_output"]["w"], params["tpcnn_output"]["b"]))
    alphas = [params["prelu"][k] for k in range(n_mid)]
    Nb2 = _pick_batch_block(N, (C + 2) * (V + 2))
    o = tpcnn_stack(u, convs, alphas, C, V, Nb2)          # (N, P, C*V)

    # final torch `.view(N, C, P, V)`: again a free reinterpretation
    return o.reshape(N, C, P, V), a


# ----------------------------------------------------------------------------
# Deterministic parameter construction (BatchNorm folded to scale/shift)
# ----------------------------------------------------------------------------
def _bn_scale_shift(key, c):
    k1, k2, k3, k4 = jax.random.split(key, 4)
    gamma = 1.0 + 0.1 * jax.random.normal(k1, (c,), jnp.float32)
    beta = 0.1 * jax.random.normal(k2, (c,), jnp.float32)
    mean = 0.1 * jax.random.normal(k3, (c,), jnp.float32)
    var = 1.0 + 0.1 * jnp.abs(jax.random.normal(k4, (c,), jnp.float32))
    scale = gamma / jnp.sqrt(var + 1e-5)
    shift = beta - mean * scale
    return scale.reshape(c, 1), shift.reshape(c, 1)


def init_params(key, n_stgcnn, n_txpcnn, input_feat, output_feat,
                seq_len, pred_seq_len, kernel_size):
    params = {"st_gcns": [], "tpcnns": [], "prelu": [], "n_txpcnn": n_txpcnn}

    for layer in range(n_stgcnn):
        cin = input_feat if layer == 0 else output_feat
        cout = output_feat
        ks = jax.random.split(jax.random.fold_in(key, 100 + layer), 9)
        p = {
            "wg": 0.3 * jax.random.normal(ks[0], (cout, cin), jnp.float32),
            "bg": 0.1 * jax.random.normal(ks[1], (cout, 1), jnp.float32),
            "wt": 0.3 * jax.random.normal(ks[3], (kernel_size, cout, cout),
                                          jnp.float32),
            "bt": 0.1 * jax.random.normal(ks[4], (cout, 1), jnp.float32),
            "a1": jnp.full((1,), 0.25, jnp.float32),   # PReLU defaults
            "ao": jnp.full((1,), 0.25, jnp.float32),
        }
        p["s1"], p["h1"] = _bn_scale_shift(ks[2], cout)
        p["s2"], p["h2"] = _bn_scale_shift(ks[5], cout)
        if cin == cout:
            p["res_mode"] = "identity"
        else:
            p["res_mode"] = "conv"
            p["wr"] = 0.3 * jax.random.normal(ks[6], (cout, cin), jnp.float32)
            p["br"] = 0.1 * jax.random.normal(ks[7], (cout, 1), jnp.float32)
            p["sr"], p["hr"] = _bn_scale_shift(ks[8], cout)
        params["st_gcns"].append(p)

    for layer in range(n_txpcnn):
        cin = seq_len if layer == 0 else pred_seq_len
        ks = jax.random.split(jax.random.fold_in(key, 200 + layer), 2)
        params["tpcnns"].append({
            "w": 0.2 * jax.random.normal(
                ks[0], (pred_seq_len, cin, kernel_size, kernel_size),
                jnp.float32),
            "b": 0.1 * jax.random.normal(ks[1], (pred_seq_len,), jnp.float32),
        })
        params["prelu"].append(jnp.full((1,), 0.25, jnp.float32))

    ks = jax.random.split(jax.random.fold_in(key, 300), 2)
    params["tpcnn_output"] = {
        "w": 0.2 * jax.random.normal(
            ks[0], (pred_seq_len, pred_seq_len, kernel_size, kernel_size),
            jnp.float32),
        "b": 0.1 * jax.random.normal(ks[1], (pred_seq_len,), jnp.float32),
    }
    return params


if __name__ == "__main__":
    key = jax.random.PRNGKey(0)

    # Small shapes consistent with the module's forward.
    n_stgcnn, n_txpcnn = 2, 3
    input_feat, output_feat = 2, 5
    seq_len, pred_seq_len = 8, 6
    kernel_size = 3
    n_nodes = 4
    batch = 2

    kv, ka, kp = jax.random.split(key, 3)
    v = jax.random.normal(kv, (batch, input_feat, seq_len, n_nodes),
                          jnp.float32)
    a = jax.random.normal(ka, (seq_len, n_nodes, n_nodes), jnp.float32)
    params = init_params(kp, n_stgcnn, n_txpcnn, input_feat, output_feat,
                         seq_len, pred_seq_len, kernel_size)

    fwd = jax.jit(functools.partial(social_stgcnn_forward, params=params))
    out_v, out_a = fwd(v, a)
    jax.block_until_ready((out_v, out_a))

    assert out_v.shape == (batch, output_feat, pred_seq_len, n_nodes), out_v.shape
    assert out_a.shape == a.shape, out_a.shape
    print("KERNEL_OK")
</pallas_src>

<mosaic_0001>
module attributes {stable_mosaic.version = 11 : i64} {
  func.func @kernel(%arg0: i32, %arg1: memref<2x2x32xf32, #tpu.memory_space<vmem>>, %arg2: memref<80x80xf32, #tpu.memory_space<vmem>>, %arg3: memref<1x80xf32, #tpu.memory_space<vmem>>, %arg4: memref<5x2xf32, #tpu.memory_space<vmem>>, %arg5: memref<5x15xf32, #tpu.memory_space<vmem>>, %arg6: memref<5x2xf32, #tpu.memory_space<vmem>>, %arg7: memref<5x5xf32, #tpu.memory_space<vmem>>, %arg8: memref<5x15xf32, #tpu.memory_space<vmem>>, %arg9: memref<5x11xf32, #tpu.memory_space<vmem>>, %arg10: memref<2x5x32xf32, #tpu.memory_space<vmem>>, %arg11: memref<2x80xf32, #tpu.memory_space<vmem>>, %arg12: memref<5x88xf32, #tpu.memory_space<vmem>>) attributes {dimension_semantics = [#tpu.dimension_semantics<parallel>], iteration_bounds = array<i64: 1>, scalar_prefetch = 0 : i64, scratch_operands = 2 : i64, tpu.core_type = #tpu.core_type<tc>, window_params = [{transform_indices = @transform_0, window_bounds = array<i64: 2, 2, 32>}, {pipeline_mode = #tpu.pipeline_mode<synchronous>, transform_indices = @transform_1, window_bounds = array<i64: 80, 80>}, {pipeline_mode = #tpu.pipeline_mode<synchronous>, transform_indices = @transform_2, window_bounds = array<i64: 1, 80>}, {pipeline_mode = #tpu.pipeline_mode<synchronous>, transform_indices = @transform_3, window_bounds = array<i64: 5, 2>}, {pipeline_mode = #tpu.pipeline_mode<synchronous>, transform_indices = @transform_4, window_bounds = array<i64: 5, 15>}, {pipeline_mode = #tpu.pipeline_mode<synchronous>, transform_indices = @transform_5, window_bounds = array<i64: 5, 2>}, {pipeline_mode = #tpu.pipeline_mode<synchronous>, transform_indices = @transform_6, window_bounds = array<i64: 5, 5>}, {pipeline_mode = #tpu.pipeline_mode<synchronous>, transform_indices = @transform_7, window_bounds = array<i64: 5, 15>}, {pipeline_mode = #tpu.pipeline_mode<synchronous>, transform_indices = @transform_8, window_bounds = array<i64: 5, 11>}, {transform_indices = @transform_9, window_bounds = array<i64: 2, 5, 32>}]} {
    %c0 = arith.constant 0 : index
    %c0_0 = arith.constant 0 : index
    %0 = vector.load %arg2[%c0, %c0_0] : memref<80x80xf32, #tpu.memory_space<vmem>>, vector<80x80xf32>
    %c0_1 = arith.constant 0 : index
    %c0_2 = arith.constant 0 : index
    %1 = vector.load %arg3[%c0_1, %c0_2] : memref<1x80xf32, #tpu.memory_space<vmem>>, vector<1x80xf32>
    %c0_3 = arith.constant 0 : index
    %c0_4 = arith.constant 0 : index
    %2 = vector.load %arg9[%c0_3, %c0_4] : memref<5x11xf32, #tpu.memory_space<vmem>>, vector<5x11xf32>
    %cst = arith.constant 0.000000e+00 : f32
    %3 = vector.broadcast %cst : f32 to vector<2x80xf32>
    %c0_5 = arith.constant 0 : index
    %c0_6 = arith.constant 0 : index
    %4 = vector.load %arg11[%c0_5, %c0_6] : memref<2x80xf32, #tpu.memory_space<vmem>>, vector<2x80xf32>
    tpu.vector_store %arg11[%c0_5, %c0_6], %3 {strides = array<i32>} : memref<2x80xf32, #tpu.memory_space<vmem>>, vector<2x80xf32>,
    %c0_7 = arith.constant 0 : index
    %c0_8 = arith.constant 0 : index
    %c0_9 = arith.constant 0 : index
    %5 = vector.load %arg1[%c0_7, %c0_8, %c0_9] : memref<2x2x32xf32, #tpu.memory_space<vmem>>, vector<1x2x32xf32>
    %6 = vector.shape_cast %5 : vector<1x2x32xf32> to vector<2x32xf32>
    %c0_10 = arith.constant 0 : index
    %c4 = arith.constant 4 : index
    %7 = vector.load %arg11[%c0_10, %c4] : memref<2x80xf32, #tpu.memory_space<vmem>>, vector<2x32xf32>
    tpu.vector_store %arg11[%c0_10, %c4], %6 {strides = array<i32>} : memref<2x80xf32, #tpu.memory_space<vmem>>, vector<2x32xf32>,
    %c1 = arith.constant 1 : index
    %c0_11 = arith.constant 0 : index
    %c0_12 = arith.constant 0 : index
    %8 = vector.load %arg1[%c1, %c0_11, %c0_12] : memref<2x2x32xf32, #tpu.memory_space<vmem>>, vector<1x2x32xf32>
    %9 = vector.shape_cast %8 : vector<1x2x32xf32> to vector<2x32xf32>
    %c0_13 = arith.constant 0 : index
    %c44 = arith.constant 44 : index
    %10 = vector.load %arg11[%c0_13, %c44] : memref<2x80xf32, #tpu.memory_space<vmem>>, vector<2x32xf32>
    tpu.vector_store %arg11[%c0_13, %c44], %9 {strides = array<i32>} : memref<2x80xf32, #tpu.memory_space<vmem>>, vector<2x32xf32>,
    %c0_14 = arith.constant 0 : index
    %c0_15 = arith.constant 0 : index
    %11 = vector.load %arg11[%c0_14, %c0_15] : memref<2x80xf32, #tpu.memory_space<vmem>>, vector<2x80xf32>
    %cst_16 = arith.constant 0.000000e+00 : f32
    %12 = vector.broadcast %cst_16 : f32 to vector<5x4xf32>
    %c0_17 = arith.constant 0 : index
    %c0_18 = arith.constant 0 : index
    %13 = vector.load %arg12[%c0_17, %c0_18] : memref<5x88xf32, #tpu.memory_space<vmem>>, vector<5x4xf32>
    tpu.vector_store %arg12[%c0_17, %c0_18], %12 {strides = array<i32>} : memref<5x88xf32, #tpu.memory_space<vmem>>, vector<5x4xf32>,
    %c0_19 = arith.constant 0 : index
    %c84 = arith.constant 84 : index
    %14 = vector.load %arg12[%c0_19, %c84] : memref<5x88xf32, #tpu.memory_space<vmem>>, vector<5x4xf32>
    tpu.vector_store %arg12[%c0_19, %c84], %12 {strides = array<i32>} : memref<5x88xf32, #tpu.memory_space<vmem>>, vector<5x4xf32>,
    %c0_20 = arith.constant 0 : index
    %c0_21 = arith.constant 0 : index
    %15 = vector.load %arg4[%c0_20, %c0_21] : memref<5x2xf32, #tpu.memory_space<vmem>>, vector<5x2xf32>
    %c0_22 = arith.constant 0 : index
    %c0_23 = arith.constant 0 : index
    %16 = vector.load %arg5[%c0_22, %c0_23] : memref<5x15xf32, #tpu.memory_space<vmem>>, vector<5x15xf32>
    %17 = vector.extract_strided_slice %2 {offsets = [0, 0], sizes = [5, 1], strides = [1, 1]} : vector<5x11xf32> to vector<5x1xf32>
    %18 = vector.extract_strided_slice %2 {offsets = [0, 1], sizes = [5, 1], strides = [1, 1]} : vector<5x11xf32> to vector<5x1xf32>
    %19 = vector.extract_strided_slice %2 {offsets = [0, 2], sizes = [5, 1], strides = [1, 1]} : vector<5x11xf32> to vector<5x1xf32>
    %20 = vector.extract_strided_slice %2 {offsets = [0, 3], sizes = [5, 1], strides = [1, 1]} : vector<5x11xf32> to vector<5x1xf32>
    %21 = vector.extract_strided_slice %2 {offsets = [0, 4], sizes = [5, 1], strides = [1, 1]} : vector<5x11xf32> to vector<5x1xf32>
    %cst_24 = arith.constant dense<0.000000e+00> : vector<5x80xf32>
    %22 = tpu.matmul %15, %11, %cst_24 {dimension_numbers = #tpu.dot_dimension_numbers<[1], [0], [0], [1], [0, 0, 1, 1], [], []>} : vector<5x2xf32>, vector<2x80xf32>, vector<5x80xf32> -> vector<5x80xf32>
    %23 = vector.broadcast %17 : vector<5x1xf32> to vector<5x80xf32>
    %24 = arith.addf %22, %23 : vector<5x80xf32>
    %cst_25 = arith.constant dense<0.000000e+00> : vector<5x80xf32>
    %25 = tpu.matmul %24, %0, %cst_25 {dimension_numbers = #tpu.dot_dimension_numbers<[1], [0], [0], [1], [0, 0, 1, 1], [], []>} : vector<5x80xf32>, vector<80x80xf32>, vector<5x80xf32> -> vector<5x80xf32>
    %26 = vector.broadcast %18 : vector<5x1xf32> to vector<5x80xf32>
    %27 = arith.addf %25, %26 : vector<5x80xf32>
    %cst_26 = arith.constant 0.000000e+00 : f32
    %28 = vector.broadcast %cst_26 : f32 to vector<5x80xf32>
    %29 = arith.cmpf oge, %27, %28 : vector<5x80xf32>
    %30 = vector.broadcast %20 : vector<5x1xf32> to vector<5x80xf32>
    %31 = arith.mulf %30, %27 : vector<5x80xf32>
    %32 = arith.select %29, %27, %31 : vector<5x80xi1>, vector<5x80xf32>
    %33 = vector.broadcast %1 : vector<1x80xf32> to vector<5x80xf32>
    %34 = arith.mulf %32, %33 : vector<5x80xf32>
    %c0_27 = arith.constant 0 : index
    %c4_28 = arith.constant 4 : index
    %35 = vector.load %arg12[%c0_27, %c4_28] : memref<5x88xf32, #tpu.memory_space<vmem>>, vector<5x80xf32>
    tpu.vector_store %arg12[%c0_27, %c4_28], %34 {strides = array<i32>} : memref<5x88xf32, #tpu.memory_space<vmem>>, vector<5x80xf32>,
    %c0_29 = arith.constant 0 : index
    %c0_30 = arith.constant 0 : index
    %36 = vector.load %arg12[%c0_29, %c0_30] : memref<5x88xf32, #tpu.memory_space<vmem>>, vector<5x80xf32>
    %c0_31 = arith.constant 0 : index
    %c4_32 = arith.constant 4 : index
    %37 = vector.load %arg12[%c0_31, %c4_32] : memref<5x88xf32, #tpu.memory_space<vmem>>, vector<5x80xf32>
    %c0_33 = arith.constant 0 : index
    %c8 = arith.constant 8 : index
    %38 = vector.load %arg12[%c0_33, %c8] : memref<5x88xf32, #tpu.memory_space<vmem>>, vector<5x80xf32>
    %39 = tpu.concatenate %36, %37, %38 in 0 : vector<5x80xf32>, vector<5x80xf32>, vector<5x80xf32> -> vector<15x80xf32>
    %cst_34 = arith.constant dense<0.000000e+00> : vector<5x80xf32>
    %40 = tpu.matmul %16, %39, %cst_34 {dimension_numbers = #tpu.dot_dimension_numbers<[1], [0], [0], [1], [0, 0, 1, 1], [], []>} : vector<5x15xf32>, vector<15x80xf32>, vector<5x80xf32> -> vector<5x80xf32>
    %41 = vector.broadcast %19 : vector<5x1xf32> to vector<5x80xf32>
    %42 = arith.addf %40, %41 : vector<5x80xf32>
    %c0_35 = arith.constant 0 : index
    %c0_36 = arith.constant 0 : index
    %43 = vector.load %arg6[%c0_35, %c0_36] : memref<5x2xf32, #tpu.memory_space<vmem>>, vector<5x2xf32>
    %44 = vector.extract_strided_slice %2 {offsets = [0, 5], sizes = [5, 1], strides = [1, 1]} : vector<5x11xf32> to vector<5x1xf32>
    %cst_37 = arith.constant dense<0.000000e+00> : vector<5x80xf32>
    %45 = tpu.matmul %43, %11, %cst_37 {dimension_numbers = #tpu.dot_dimension_numbers<[1], [0], [0], [1], [0, 0, 1, 1], [], []>} : vector<5x2xf32>, vector<2x80xf32>, vector<5x80xf32> -> vector<5x80xf32>
    %46 = arith.addf %42, %45 : vector<5x80xf32>
    %47 = vector.broadcast %44 : vector<5x1xf32> to vector<5x80xf32>
    %48 = arith.addf %46, %47 : vector<5x80xf32>
    %cst_38 = arith.constant 0.000000e+00 : f32
    %49 = vector.broadcast %cst_38 : f32 to vector<5x80xf32>
    %50 = arith.cmpf oge, %48, %49 : vector<5x80xf32>
    %51 = vector.broadcast %21 : vector<5x1xf32> to vector<5x80xf32>
    %52 = arith.mulf %51, %48 : vector<5x80xf32>
    %53 = arith.select %50, %48, %52 : vector<5x80xi1>, vector<5x80xf32>
    %c0_39 = arith.constant 0 : index
    %c0_40 = arith.constant 0 : index
    %54 = vector.load %arg7[%c0_39, %c0_40] : memref<5x5xf32, #tpu.memory_space<vmem>>, vector<5x5xf32>
    %c0_41 = arith.constant 0 : index
    %c0_42 = arith.constant 0 : index
    %55 = vector.load %arg8[%c0_41, %c0_42] : memref<5x15xf32, #tpu.memory_space<vmem>>, vector<5x15xf32>
    %56 = vector.extract_strided_slice %2 {offsets = [0, 6], sizes = [5, 1], strides = [1, 1]} : vector<5x11xf32> to vector<5x1xf32>
    %57 = vector.extract_strided_slice %2 {offsets = [0, 7], sizes = [5, 1], strides = [1, 1]} : vector<5x11xf32> to vector<5x1xf32>
    %58 = vector.extract_strided_slice %2 {offsets = [0, 8], sizes = [5, 1], strides = [1, 1]} : vector<5x11xf32> to vector<5x1xf32>
    %59 = vector.extract_strided_slice %2 {offsets = [0, 9], sizes = [5, 1], strides = [1, 1]} : vector<5x11xf32> to vector<5x1xf32>
    %60 = vector.extract_strided_slice %2 {offsets = [0, 10], sizes = [5, 1], strides = [1, 1]} : vector<5x11xf32> to vector<5x1xf32>
    %cst_43 = arith.constant dense<0.000000e+00> : vector<5x80xf32>
    %61 = tpu.matmul %54, %53, %cst_43 {dimension_numbers = #tpu.dot_dimension_numbers<[1], [0], [0], [1], [0, 0, 1, 1], [], []>} : vector<5x5xf32>, vector<5x80xf32>, vector<5x80xf32> -> vector<5x80xf32>
    %62 = vector.broadcast %56 : vector<5x1xf32> to vector<5x80xf32>
    %63 = arith.addf %61, %62 : vector<5x80xf32>
    %cst_44 = arith.constant dense<0.000000e+00> : vector<5x80xf32>
    %64 = tpu.matmul %63, %0, %cst_44 {dimension_numbers = #tpu.dot_dimension_numbers<[1], [0], [0], [1], [0, 0, 1, 1], [], []>} : vector<5x80xf32>, vector<80x80xf32>, vector<5x80xf32> -> vector<5x80xf32>
    %65 = vector.broadcast %57 : vector<5x1xf32> to vector<5x80xf32>
    %66 = arith.addf %64, %65 : vector<5x80xf32>
    %cst_45 = arith.constant 0.000000e+00 : f32
    %67 = vector.broadcast %cst_45 : f32 to vector<5x80xf32>
    %68 = arith.cmpf oge, %66, %67 : vector<5x80xf32>
    %69 = vector.broadcast %59 : vector<5x1xf32> to vector<5x80xf32>
    %70 = arith.mulf %69, %66 : vector<5x80xf32>
    %71 = arith.select %68, %66, %70 : vector<5x80xi1>, vector<5x80xf32>
    %72 = vector.broadcast %1 : vector<1x80xf32> to vector<5x80xf32>
    %73 = arith.mulf %71, %72 : vector<5x80xf32>
    %c0_46 = arith.constant 0 : index
    %c4_47 = arith.constant 4 : index
    %74 = vector.load %arg12[%c0_46, %c4_47] : memref<5x88xf32, #tpu.memory_space<vmem>>, vector<5x80xf32>
    tpu.vector_store %arg12[%c0_46, %c4_47], %73 {strides = array<i32>} : memref<5x88xf32, #tpu.memory_space<vmem>>, vector<5x80xf32>,
    %c0_48 = arith.constant 0 : index
    %c0_49 = arith.constant 0 : index
    %75 = vector.load %arg12[%c0_48, %c0_49] : memref<5x88xf32, #tpu.memory_space<vmem>>, vector<5x80xf32>
    %c0_50 = arith.constant 0 : index
    %c4_51 = arith.constant 4 : index
    %76 = vector.load %arg12[%c0_50, %c4_51] : memref<5x88xf32, #tpu.memory_space<vmem>>, vector<5x80xf32>
    %c0_52 = arith.constant 0 : index
    %c8_53 = arith.constant 8 : index
    %77 = vector.load %arg12[%c0_52, %c8_53] : memref<5x88xf32, #tpu.memory_space<vmem>>, vector<5x80xf32>
    %78 = tpu.concatenate %75, %76, %77 in 0 : vector<5x80xf32>, vector<5x80xf32>, vector<5x80xf32> -> vector<15x80xf32>
    %cst_54 = arith.constant dense<0.000000e+00> : vector<5x80xf32>
    %79 = tpu.matmul %55, %78, %cst_54 {dimension_numbers = #tpu.dot_dimension_numbers<[1], [0], [0], [1], [0, 0, 1, 1], [], []>} : vector<5x15xf32>, vector<15x80xf32>, vector<5x80xf32> -> vector<5x80xf32>
    %80 = vector.broadcast %58 : vector<5x1xf32> to vector<5x80xf32>
    %81 = arith.addf %79, %80 : vector<5x80xf32>
    %82 = arith.addf %81, %53 : vector<5x80xf32>
    %cst_55 = arith.constant 0.000000e+00 : f32
    %83 = vector.broadcast %cst_55 : f32 to vector<5x80xf32>
    %84 = arith.cmpf oge, %82, %83 : vector<5x80xf32>
    %85 = vector.broadcast %60 : vector<5x1xf32> to vector<5x80xf32>
    %86 = arith.mulf %85, %82 : vector<5x80xf32>
    %87 = arith.select %84, %82, %86 : vector<5x80xi1>, vector<5x80xf32>
    %88 = vector.extract_strided_slice %87 {offsets = [0, 4], sizes = [5, 32], strides = [1, 1]} : vector<5x80xf32> to vector<5x32xf32>
    %c0_56 = arith.constant 0 : index
    %c0_57 = arith.constant 0 : index
    %c0_58 = arith.constant 0 : index
    %89 = vector.load %arg10[%c0_56, %c0_57, %c0_58] : memref<2x5x32xf32, #tpu.memory_space<vmem>>, vector<1x5x32xf32>
    %90 = vector.shape_cast %89 : vector<1x5x32xf32> to vector<5x32xf32>
    %91 = vector.shape_cast %88 : vector<5x32xf32> to vector<1x5x32xf32>
    tpu.vector_store %arg10[%c0_56, %c0_57, %c0_58], %91 {strides = array<i32>} : memref<2x5x32xf32, #tpu.memory_space<vmem>>, vector<1x5x32xf32>,
    %92 = vector.extract_strided_slice %87 {offsets = [0, 44], sizes = [5, 32], strides = [1, 1]} : vector<5x80xf32> to vector<5x32xf32>
    %c1_59 = arith.constant 1 : index
    %c0_60 = arith.constant 0 : index
    %c0_61 = arith.constant 0 : index
    %93 = vector.load %arg10[%c1_59, %c0_60, %c0_61] : memref<2x5x32xf32, #tpu.memory_space<vmem>>, vector<1x5x32xf32>
    %94 = vector.shape_cast %93 : vector<1x5x32xf32> to vector<5x32xf32>
    %95 = vector.shape_cast %92 : vector<5x32xf32> to vector<1x5x32xf32>
    tpu.vector_store %arg10[%c1_59, %c0_60, %c0_61], %95 {strides = array<i32>} : memref<2x5x32xf32, #tpu.memory_space<vmem>>, vector<1x5x32xf32>,
    return
  }
  func.func @transform_0(%arg0: i32) -> (i32, i32, i32) {
    %c0_i32 = arith.constant 0 : i32
    %c0_i32_0 = arith.constant 0 : i32
    %c0_i32_1 = arith.constant 0 : i32
    return %arg0, %c0_i32, %c0_i32_0 : i32, i32, i32
  }
  func.func @transform_1(%arg0: i32) -> (i32, i32) {
    %c0_i32 = arith.constant 0 : i32
    %c0_i32_0 = arith.constant 0 : i32
    %c0_i32_1 = arith.constant 0 : i32
    return %c0_i32, %c0_i32_0 : i32, i32
  }
  func.func @transform_2(%arg0: i32) -> (i32, i32) {
    %c0_i32 = arith.constant 0 : i32
    %c0_i32_0 = arith.constant 0 : i32
    %c0_i32_1 = arith.constant 0 : i32
    return %c0_i32, %c0_i32_0 : i32, i32
  }
  func.func @transform_3(%arg0: i32) -> (i32, i32) {
    %c0_i32 = arith.constant 0 : i32
    %c0_i32_0 = arith.constant 0 : i32
    %c0_i32_1 = arith.constant 0 : i32
    return %c0_i32, %c0_i32_0 : i32, i32
  }
  func.func @transform_4(%arg0: i32) -> (i32, i32) {
    %c0_i32 = arith.constant 0 : i32
    %c0_i32_0 = arith.constant 0 : i32
    %c0_i32_1 = arith.constant 0 : i32
    return %c0_i32, %c0_i32_0 : i32, i32
  }
  func.func @transform_5(%arg0: i32) -> (i32, i32) {
    %c0_i32 = arith.constant 0 : i32
    %c0_i32_0 = arith.constant 0 : i32
    %c0_i32_1 = arith.constant 0 : i32
    return %c0_i32, %c0_i32_0 : i32, i32
  }
  func.func @transform_6(%arg0: i32) -> (i32, i32) {
    %c0_i32 = arith.constant 0 : i32
    %c0_i32_0 = arith.constant 0 : i32
    %c0_i32_1 = arith.constant 0 : i32
    return %c0_i32, %c0_i32_0 : i32, i32
  }
  func.func @transform_7(%arg0: i32) -> (i32, i32) {
    %c0_i32 = arith.constant 0 : i32
    %c0_i32_0 = arith.constant 0 : i32
    %c0_i32_1 = arith.constant 0 : i32
    return %c0_i32, %c0_i32_0 : i32, i32
  }
  func.func @transform_8(%arg0: i32) -> (i32, i32) {
    %c0_i32 = arith.constant 0 : i32
    %c0_i32_0 = arith.constant 0 : i32
    %c0_i32_1 = arith.constant 0 : i32
    return %c0_i32, %c0_i32_0 : i32, i32
  }
  func.func @transform_9(%arg0: i32) -> (i32, i32, i32) {
    %c0_i32 = arith.constant 0 : i32
    %c0_i32_0 = arith.constant 0 : i32
    %c0_i32_1 = arith.constant 0 : i32
    return %arg0, %c0_i32, %c0_i32_0 : i32, i32, i32
  }
}

module attributes {stable_mosaic.version = 11 : i64} {
  func.func @kernel(%arg0: i32, %arg1: memref<2x8x20xf32, #tpu.memory_space<vmem>>, %arg2: memref<20x42xf32, #tpu.memory_space<vmem>>, %arg3: memref<42x20xf32, #tpu.memory_space<vmem>>, %arg4: memref<1x84xf32, #tpu.memory_space<vmem>>, %arg5: memref<6x72xf32, #tpu.memory_space<vmem>>, %arg6: memref<6x54xf32, #tpu.memory_space<vmem>>, %arg7: memref<6x54xf32, #tpu.memory_space<vmem>>, %arg8: memref<6x5xf32, #tpu.memory_space<vmem>>, %arg9: memref<2x6x20xf32, #tpu.memory_space<vmem>>, %arg10: memref<8x98xf32, #tpu.memory_space<vmem>>) attributes {dimension_semantics = [#tpu.dimension_semantics<parallel>], iteration_bounds = array<i64: 1>, scalar_prefetch = 0 : i64, scratch_operands = 1 : i64, tpu.core_type = #tpu.core_type<tc>, window_params = [{transform_indices = @transform_0, window_bounds = array<i64: 2, 8, 20>}, {pipeline_mode = #tpu.pipeline_mode<synchronous>, transform_indices = @transform_1, window_bounds = array<i64: 20, 42>}, {pipeline_mode = #tpu.pipeline_mode<synchronous>, transform_indices = @transform_2, window_bounds = array<i64: 42, 20>}, {pipeline_mode = #tpu.pipeline_mode<synchronous>, transform_indices = @transform_3, window_bounds = array<i64: 1, 84>}, {pipeline_mode = #tpu.pipeline_mode<synchronous>, transform_indices = @transform_4, window_bounds = array<i64: 6, 72>}, {pipeline_mode = #tpu.pipeline_mode<synchronous>, transform_indices = @transform_5, window_bounds = array<i64: 6, 54>}, {pipeline_mode = #tpu.pipeline_mode<synchronous>, transform_indices = @transform_6, window_bounds = array<i64: 6, 54>}, {pipeline_mode = #tpu.pipeline_mode<synchronous>, transform_indices = @transform_7, window_bounds = array<i64: 6, 5>}, {transform_indices = @transform_8, window_bounds = array<i64: 2, 6, 20>}]} {
    %c0 = arith.constant 0 : index
    %c0_0 = arith.constant 0 : index
    %0 = vector.load %arg2[%c0, %c0_0] : memref<20x42xf32, #tpu.memory_space<vmem>>, vector<20x42xf32>
    %c0_1 = arith.constant 0 : index
    %c0_2 = arith.constant 0 : index
    %1 = vector.load %arg3[%c0_1, %c0_2] : memref<42x20xf32, #tpu.memory_space<vmem>>, vector<42x20xf32>
    %c0_3 = arith.constant 0 : index
    %c0_4 = arith.constant 0 : index
    %2 = vector.load %arg4[%c0_3, %c0_4] : memref<1x84xf32, #tpu.memory_space<vmem>>, vector<1x84xf32>
    %c0_5 = arith.constant 0 : index
    %c0_6 = arith.constant 0 : index
    %3 = vector.load %arg8[%c0_5, %c0_6] : memref<6x5xf32, #tpu.memory_space<vmem>>, vector<6x5xf32>
    %cst = arith.constant 0.000000e+00 : f32
    %4 = vector.broadcast %cst : f32 to vector<8x7xf32>
    %c0_7 = arith.constant 0 : index
    %c0_8 = arith.constant 0 : index
    %5 = vector.load %arg10[%c0_7, %c0_8] : memref<8x98xf32, #tpu.memory_space<vmem>>, vector<8x7xf32>
    tpu.vector_store %arg10[%c0_7, %c0_8], %4 {strides = array<i32>} : memref<8x98xf32, #tpu.memory_space<vmem>>, vector<8x7xf32>,
    %c0_9 = arith.constant 0 : index
    %c91 = arith.constant 91 : index
    %6 = vector.load %arg10[%c0_9, %c91] : memref<8x98xf32, #tpu.memory_space<vmem>>, vector<8x7xf32>
    tpu.vector_store %arg10[%c0_9, %c91], %4 {strides = array<i32>} : memref<8x98xf32, #tpu.memory_space<vmem>>, vector<8x7xf32>,
    %c0_10 = arith.constant 0 : index
    %c0_11 = arith.constant 0 : index
    %c0_12 = arith.constant 0 : index
    %7 = vector.load %arg1[%c0_10, %c0_11, %c0_12] : memref<2x8x20xf32, #tpu.memory_space<vmem>>, vector<1x8x20xf32>
    %8 = vector.shape_cast %7 : vector<1x8x20xf32> to vector<8x20xf32>
    %cst_13 = arith.constant dense<0.000000e+00> : vector<8x42xf32>
    %9 = tpu.matmul %8, %0, %cst_13 {dimension_numbers = #tpu.dot_dimension_numbers<[1], [0], [0], [1], [0, 0, 1, 1], [], []>} : vector<8x20xf32>, vector<20x42xf32>, vector<8x42xf32> -> vector<8x42xf32>
    %c0_14 = arith.constant 0 : index
    %c7 = arith.constant 7 : index
    %10 = vector.load %arg10[%c0_14, %c7] : memref<8x98xf32, #tpu.memory_space<vmem>>, vector<8x42xf32>
    tpu.vector_store %arg10[%c0_14, %c7], %9 {strides = array<i32>} : memref<8x98xf32, #tpu.memory_space<vmem>>, vector<8x42xf32>,
    %c1 = arith.constant 1 : index
    %c0_15 = arith.constant 0 : index
    %c0_16 = arith.constant 0 : index
    %11 = vector.load %arg1[%c1, %c0_15, %c0_16] : memref<2x8x20xf32, #tpu.memory_space<vmem>>, vector<1x8x20xf32>
    %12 = vector.shape_cast %11 : vector<1x8x20xf32> to vector<8x20xf32>
    %cst_17 = arith.constant dense<0.000000e+00> : vector<8x42xf32>
    %13 = tpu.matmul %12, %0, %cst_17 {dimension_numbers = #tpu.dot_dimension_numbers<[1], [0], [0], [1], [0, 0, 1, 1], [], []>} : vector<8x20xf32>, vector<20x42xf32>, vector<8x42xf32> -> vector<8x42xf32>
    %c0_18 = arith.constant 0 : index
    %c49 = arith.constant 49 : index
    %14 = vector.load %arg10[%c0_18, %c49] : memref<8x98xf32, #tpu.memory_space<vmem>>, vector<8x42xf32>
    tpu.vector_store %arg10[%c0_18, %c49], %13 {strides = array<i32>} : memref<8x98xf32, #tpu.memory_space<vmem>>, vector<8x42xf32>,
    %15 = vector.extract_strided_slice %3 {offsets = [0, 0], sizes = [6, 1], strides = [1, 1]} : vector<6x5xf32> to vector<6x1xf32>
    %16 = vector.extract_strided_slice %3 {offsets = [0, 1], sizes = [6, 1], strides = [1, 1]} : vector<6x5xf32> to vector<6x1xf32>
    %c0_19 = arith.constant 0 : index
    %c0_20 = arith.constant 0 : index
    %17 = vector.load %arg5[%c0_19, %c0_20] : memref<6x72xf32, #tpu.memory_space<vmem>>, vector<6x72xf32>
    %c0_21 = arith.constant 0 : index
    %c0_22 = arith.constant 0 : index
    %18 = vector.load %arg10[%c0_21, %c0_22] : memref<8x98xf32, #tpu.memory_space<vmem>>, vector<8x84xf32>
    %c0_23 = arith.constant 0 : index
    %c1_24 = arith.constant 1 : index
    %19 = vector.load %arg10[%c0_23, %c1_24] : memref<8x98xf32, #tpu.memory_space<vmem>>, vector<8x84xf32>
    %c0_25 = arith.constant 0 : index
    %c2 = arith.constant 2 : index
    %20 = vector.load %arg10[%c0_25, %c2] : memref<8x98xf32, #tpu.memory_space<vmem>>, vector<8x84xf32>
    %c0_26 = arith.constant 0 : index
    %c6 = arith.constant 6 : index
    %21 = vector.load %arg10[%c0_26, %c6] : memref<8x98xf32, #tpu.memory_space<vmem>>, vector<8x84xf32>
    %c0_27 = arith.constant 0 : index
    %c7_28 = arith.constant 7 : index
    %22 = vector.load %arg10[%c0_27, %c7_28] : memref<8x98xf32, #tpu.memory_space<vmem>>, vector<8x84xf32>
    %c0_29 = arith.constant 0 : index
    %c8 = arith.constant 8 : index
    %23 = vector.load %arg10[%c0_29, %c8] : memref<8x98xf32, #tpu.memory_space<vmem>>, vector<8x84xf32>
    %c0_30 = arith.constant 0 : index
    %c12 = arith.constant 12 : index
    %24 = vector.load %arg10[%c0_30, %c12] : memref<8x98xf32, #tpu.memory_space<vmem>>, vector<8x84xf32>
    %c0_31 = arith.constant 0 : index
    %c13 = arith.constant 13 : index
    %25 = vector.load %arg10[%c0_31, %c13] : memref<8x98xf32, #tpu.memory_space<vmem>>, vector<8x84xf32>
    %c0_32 = arith.constant 0 : index
    %c14 = arith.constant 14 : index
    %26 = vector.load %arg10[%c0_32, %c14] : memref<8x98xf32, #tpu.memory_space<vmem>>, vector<8x84xf32>
    %27 = tpu.concatenate %18, %19, %20, %21, %22, %23, %24, %25, %26 in 0 : vector<8x84xf32>, vector<8x84xf32>, vector<8x84xf32>, vector<8x84xf32>, vector<8x84xf32>, vector<8x84xf32>, vector<8x84xf32>, vector<8x84xf32>, vector<8x84xf32> -> vector<72x84xf32>
    %cst_33 = arith.constant dense<0.000000e+00> : vector<6x84xf32>
    %28 = tpu.matmul %17, %27, %cst_33 {dimension_numbers = #tpu.dot_dimension_numbers<[1], [0], [0], [1], [0, 0, 1, 1], [], []>} : vector<6x72xf32>, vector<72x84xf32>, vector<6x84xf32> -> vector<6x84xf32>
    %29 = vector.broadcast %15 : vector<6x1xf32> to vector<6x84xf32>
    %30 = arith.addf %28, %29 : vector<6x84xf32>
    %cst_34 = arith.constant 0.000000e+00 : f32
    %31 = vector.broadcast %cst_34 : f32 to vector<6x84xf32>
    %32 = arith.cmpf oge, %30, %31 : vector<6x84xf32>
    %33 = vector.broadcast %16 : vector<6x1xf32> to vector<6x84xf32>
    %34 = arith.mulf %33, %30 : vector<6x84xf32>
    %35 = arith.select %32, %30, %34 : vector<6x84xi1>, vector<6x84xf32>
    %36 = vector.broadcast %2 : vector<1x84xf32> to vector<6x84xf32>
    %37 = arith.mulf %35, %36 : vector<6x84xf32>
    %38 = vector.extract_strided_slice %3 {offsets = [0, 2], sizes = [6, 1], strides = [1, 1]} : vector<6x5xf32> to vector<6x1xf32>
    %39 = vector.extract_strided_slice %3 {offsets = [0, 3], sizes = [6, 1], strides = [1, 1]} : vector<6x5xf32> to vector<6x1xf32>
    %c0_35 = arith.constant 0 : index
    %c7_36 = arith.constant 7 : index
    %40 = vector.load %arg10[%c0_35, %c7_36] : memref<8x98xf32, #tpu.memory_space<vmem>>, vector<6x84xf32>
    tpu.vector_store %arg10[%c0_35, %c7_36], %37 {strides = array<i32>} : memref<8x98xf32, #tpu.memory_space<vmem>>, vector<6x84xf32>,
    %c0_37 = arith.constant 0 : index
    %c0_38 = arith.constant 0 : index
    %41 = vector.load %arg6[%c0_37, %c0_38] : memref<6x54xf32, #tpu.memory_space<vmem>>, vector<6x54xf32>
    %c0_39 = arith.constant 0 : index
    %c0_40 = arith.constant 0 : index
    %42 = vector.load %arg10[%c0_39, %c0_40] : memref<8x98xf32, #tpu.memory_space<vmem>>, vector<6x84xf32>
    %c0_41 = arith.constant 0 : index
    %c1_42 = arith.constant 1 : index
    %43 = vector.load %arg10[%c0_41, %c1_42] : memref<8x98xf32, #tpu.memory_space<vmem>>, vector<6x84xf32>
    %c0_43 = arith.constant 0 : index
    %c2_44 = arith.constant 2 : index
    %44 = vector.load %arg10[%c0_43, %c2_44] : memref<8x98xf32, #tpu.memory_space<vmem>>, vector<6x84xf32>
    %c0_45 = arith.constant 0 : index
    %c6_46 = arith.constant 6 : index
    %45 = vector.load %arg10[%c0_45, %c6_46] : memref<8x98xf32, #tpu.memory_space<vmem>>, vector<6x84xf32>
    %c0_47 = arith.constant 0 : index
    %c7_48 = arith.constant 7 : index
    %46 = vector.load %arg10[%c0_47, %c7_48] : memref<8x98xf32, #tpu.memory_space<vmem>>, vector<6x84xf32>
    %c0_49 = arith.constant 0 : index
    %c8_50 = arith.constant 8 : index
    %47 = vector.load %arg10[%c0_49, %c8_50] : memref<8x98xf32, #tpu.memory_space<vmem>>, vector<6x84xf32>
    %c0_51 = arith.constant 0 : index
    %c12_52 = arith.constant 12 : index
    %48 = vector.load %arg10[%c0_51, %c12_52] : memref<8x98xf32, #tpu.memory_space<vmem>>, vector<6x84xf32>
    %c0_53 = arith.constant 0 : index
    %c13_54 = arith.constant 13 : index
    %49 = vector.load %arg10[%c0_53, %c13_54] : memref<8x98xf32, #tpu.memory_space<vmem>>, vector<6x84xf32>
    %c0_55 = arith.constant 0 : index
    %c14_56 = arith.constant 14 : index
    %50 = vector.load %arg10[%c0_55, %c14_56] : memref<8x98xf32, #tpu.memory_space<vmem>>, vector<6x84xf32>
    %51 = tpu.concatenate %42, %43, %44, %45, %46, %47, %48, %49, %50 in 0 : vector<6x84xf32>, vector<6x84xf32>, vector<6x84xf32>, vector<6x84xf32>, vector<6x84xf32>, vector<6x84xf32>, vector<6x84xf32>, vector<6x84xf32>, vector<6x84xf32> -> vector<54x84xf32>
    %cst_57 = arith.constant dense<0.000000e+00> : vector<6x84xf32>
    %52 = tpu.matmul %41, %51, %cst_57 {dimension_numbers = #tpu.dot_dimension_numbers<[1], [0], [0], [1], [0, 0, 1, 1], [], []>} : vector<6x54xf32>, vector<54x84xf32>, vector<6x84xf32> -> vector<6x84xf32>
    %53 = vector.broadcast %38 : vector<6x1xf32> to vector<6x84xf32>
    %54 = arith.addf %52, %53 : vector<6x84xf32>
    %cst_58 = arith.constant 0.000000e+00 : f32
    %55 = vector.broadcast %cst_58 : f32 to vector<6x84xf32>
    %56 = arith.cmpf oge, %54, %55 : vector<6x84xf32>
    %57 = vector.broadcast %39 : vector<6x1xf32> to vector<6x84xf32>
    %58 = arith.mulf %57, %54 : vector<6x84xf32>
    %59 = arith.select %56, %54, %58 : vector<6x84xi1>, vector<6x84xf32>
    %60 = vector.broadcast %2 : vector<1x84xf32> to vector<6x84xf32>
    %61 = arith.mulf %59, %60 : vector<6x84xf32>
    %62 = arith.addf %37, %61 : vector<6x84xf32>
    %63 = vector.extract_strided_slice %3 {offsets = [0, 4], sizes = [6, 1], strides = [1, 1]} : vector<6x5xf32> to vector<6x1xf32>
    %c0_59 = arith.constant 0 : index
    %c7_60 = arith.constant 7 : index
    %64 = vector.load %arg10[%c0_59, %c7_60] : memref<8x98xf32, #tpu.memory_space<vmem>>, vector<6x84xf32>
    tpu.vector_store %arg10[%c0_59, %c7_60], %62 {strides = array<i32>} : memref<8x98xf32, #tpu.memory_space<vmem>>, vector<6x84xf32>,
    %c0_61 = arith.constant 0 : index
    %c0_62 = arith.constant 0 : index
    %65 = vector.load %arg7[%c0_61, %c0_62] : memref<6x54xf32, #tpu.memory_space<vmem>>, vector<6x54xf32>
    %c0_63 = arith.constant 0 : index
    %c0_64 = arith.constant 0 : index
    %66 = vector.load %arg10[%c0_63, %c0_64] : memref<8x98xf32, #tpu.memory_space<vmem>>, vector<6x84xf32>
    %c0_65 = arith.constant 0 : index
    %c1_66 = arith.constant 1 : index
    %67 = vector.load %arg10[%c0_65, %c1_66] : memref<8x98xf32, #tpu.memory_space<vmem>>, vector<6x84xf32>
    %c0_67 = arith.constant 0 : index
    %c2_68 = arith.constant 2 : index
    %68 = vector.load %arg10[%c0_67, %c2_68] : memref<8x98xf32, #tpu.memory_space<vmem>>, vector<6x84xf32>
    %c0_69 = arith.constant 0 : index
    %c6_70 = arith.constant 6 : index
    %69 = vector.load %arg10[%c0_69, %c6_70] : memref<8x98xf32, #tpu.memory_space<vmem>>, vector<6x84xf32>
    %c0_71 = arith.constant 0 : index
    %c7_72 = arith.constant 7 : index
    %70 = vector.load %arg10[%c0_71, %c7_72] : memref<8x98xf32, #tpu.memory_space<vmem>>, vector<6x84xf32>
    %c0_73 = arith.constant 0 : index
    %c8_74 = arith.constant 8 : index
    %71 = vector.load %arg10[%c0_73, %c8_74] : memref<8x98xf32, #tpu.memory_space<vmem>>, vector<6x84xf32>
    %c0_75 = arith.constant 0 : index
    %c12_76 = arith.constant 12 : index
    %72 = vector.load %arg10[%c0_75, %c12_76] : memref<8x98xf32, #tpu.memory_space<vmem>>, vector<6x84xf32>
    %c0_77 = arith.constant 0 : index
    %c13_78 = arith.constant 13 : index
    %73 = vector.load %arg10[%c0_77, %c13_78] : memref<8x98xf32, #tpu.memory_space<vmem>>, vector<6x84xf32>
    %c0_79 = arith.constant 0 : index
    %c14_80 = arith.constant 14 : index
    %74 = vector.load %arg10[%c0_79, %c14_80] : memref<8x98xf32, #tpu.memory_space<vmem>>, vector<6x84xf32>
    %75 = tpu.concatenate %66, %67, %68, %69, %70, %71, %72, %73, %74 in 0 : vector<6x84xf32>, vector<6x84xf32>, vector<6x84xf32>, vector<6x84xf32>, vector<6x84xf32>, vector<6x84xf32>, vector<6x84xf32>, vector<6x84xf32>, vector<6x84xf32> -> vector<54x84xf32>
    %cst_81 = arith.constant dense<0.000000e+00> : vector<6x84xf32>
    %76 = tpu.matmul %65, %75, %cst_81 {dimension_numbers = #tpu.dot_dimension_numbers<[1], [0], [0], [1], [0, 0, 1, 1], [], []>} : vector<6x54xf32>, vector<54x84xf32>, vector<6x84xf32> -> vector<6x84xf32>
    %77 = vector.broadcast %63 : vector<6x1xf32> to vector<6x84xf32>
    %78 = arith.addf %76, %77 : vector<6x84xf32>
    %79 = vector.extract_strided_slice %78 {offsets = [0, 0], sizes = [6, 42], strides = [1, 1]} : vector<6x84xf32> to vector<6x42xf32>
    %cst_82 = arith.constant dense<0.000000e+00> : vector<6x20xf32>
    %80 = tpu.matmul %79, %1, %cst_82 {dimension_numbers = #tpu.dot_dimension_numbers<[1], [0], [0], [1], [0, 0, 1, 1], [], []>} : vector<6x42xf32>, vector<42x20xf32>, vector<6x20xf32> -> vector<6x20xf32>
    %c0_83 = arith.constant 0 : index
    %c0_84 = arith.constant 0 : index
    %c0_85 = arith.constant 0 : index
    %81 = vector.load %arg9[%c0_83, %c0_84, %c0_85] : memref<2x6x20xf32, #tpu.memory_space<vmem>>, vector<1x6x20xf32>
    %82 = vector.shape_cast %81 : vector<1x6x20xf32> to vector<6x20xf32>
    %83 = vector.shape_cast %80 : vector<6x20xf32> to vector<1x6x20xf32>
    tpu.vector_store %arg9[%c0_83, %c0_84, %c0_85], %83 {strides = array<i32>} : memref<2x6x20xf32, #tpu.memory_space<vmem>>, vector<1x6x20xf32>,
    %84 = vector.extract_strided_slice %78 {offsets = [0, 42], sizes = [6, 42], strides = [1, 1]} : vector<6x84xf32> to vector<6x42xf32>
    %cst_86 = arith.constant dense<0.000000e+00> : vector<6x20xf32>
    %85 = tpu.matmul %84, %1, %cst_86 {dimension_numbers = #tpu.dot_dimension_numbers<[1], [0], [0], [1], [0, 0, 1, 1], [], []>} : vector<6x42xf32>, vector<42x20xf32>, vector<6x20xf32> -> vector<6x20xf32>
    %c1_87 = arith.constant 1 : index
    %c0_88 = arith.constant 0 : index
    %c0_89 = arith.constant 0 : index
    %86 = vector.load %arg9[%c1_87, %c0_88, %c0_89] : memref<2x6x20xf32, #tpu.memory_space<vmem>>, vector<1x6x20xf32>
    %87 = vector.shape_cast %86 : vector<1x6x20xf32> to vector<6x20xf32>
    %88 = vector.shape_cast %85 : vector<6x20xf32> to vector<1x6x20xf32>
    tpu.vector_store %arg9[%c1_87, %c0_88, %c0_89], %88 {strides = array<i32>} : memref<2x6x20xf32, #tpu.memory_space<vmem>>, vector<1x6x20xf32>,
    return
  }
  func.func @transform_0(%arg0: i32) -> (i32, i32, i32) {
    %c0_i32 = arith.constant 0 : i32
    %c0_i32_0 = arith.constant 0 : i32
    %c0_i32_1 = arith.constant 0 : i32
    return %arg0, %c0_i32, %c0_i32_0 : i32, i32, i32
  }
  func.func @transform_1(%arg0: i32) -> (i32, i32) {
    %c0_i32 = arith.constant 0 : i32
    %c0_i32_0 = arith.constant 0 : i32
    %c0_i32_1 = arith.constant 0 : i32
    return %c0_i32, %c0_i32_0 : i32, i32
  }
  func.func @transform_2(%arg0: i32) -> (i32, i32) {
    %c0_i32 = arith.constant 0 : i32
    %c0_i32_0 = arith.constant 0 : i32
    %c0_i32_1 = arith.constant 0 : i32
    return %c0_i32, %c0_i32_0 : i32, i32
  }
  func.func @transform_3(%arg0: i32) -> (i32, i32) {
    %c0_i32 = arith.constant 0 : i32
    %c0_i32_0 = arith.constant 0 : i32
    %c0_i32_1 = arith.constant 0 : i32
    return %c0_i32, %c0_i32_0 : i32, i32
  }
  func.func @transform_4(%arg0: i32) -> (i32, i32) {
    %c0_i32 = arith.constant 0 : i32
    %c0_i32_0 = arith.constant 0 : i32
    %c0_i32_1 = arith.constant 0 : i32
    return %c0_i32, %c0_i32_0 : i32, i32
  }
  func.func @transform_5(%arg0: i32) -> (i32, i32) {
    %c0_i32 = arith.constant 0 : i32
    %c0_i32_0 = arith.constant 0 : i32
    %c0_i32_1 = arith.constant 0 : i32
    return %c0_i32, %c0_i32_0 : i32, i32
  }
  func.func @transform_6(%arg0: i32) -> (i32, i32) {
    %c0_i32 = arith.constant 0 : i32
    %c0_i32_0 = arith.constant 0 : i32
    %c0_i32_1 = arith.constant 0 : i32
    return %c0_i32, %c0_i32_0 : i32, i32
  }
  func.func @transform_7(%arg0: i32) -> (i32, i32) {
    %c0_i32 = arith.constant 0 : i32
    %c0_i32_0 = arith.constant 0 : i32
    %c0_i32_1 = arith.constant 0 : i32
    return %c0_i32, %c0_i32_0 : i32, i32
  }
  func.func @transform_8(%arg0: i32) -> (i32, i32, i32) {
    %c0_i32 = arith.constant 0 : i32
    %c0_i32_0 = arith.constant 0 : i32
    %c0_i32_1 = arith.constant 0 : i32
    return %arg0, %c0_i32, %c0_i32_0 : i32, i32, i32
  }
}

</mosaic_0001>

<llo_original>
// kernel: social_stgcnn_forward.3
$region0: #{social_stgcnn_forward.3}
  #allocation0 [shape = 'u32[]', space=smem, size = 0x4, offset = 0x4, fixed_abs, tag = 'smem constant byte address 0x4 - core index']
  #allocation1 [shape = 'u32[144,128]{1,0:T(1,128)}', space=vmem, size = 0x12000, scoped, tag = 'internal scratch']
  #allocation2 [shape = 'f32[8,98]{1,0:T(8,128)}', space=vmem, size = 0x1000, scoped, tag = 'scratch operand']
  %s0 = inlined_call_operand.vmem [shape: f32[2,8,20], index: 0, kind: input, shape index: {}]
  %s1 = inlined_call_operand.vmem [shape: f32[20,42], index: 1, kind: input, shape index: {}]
  %s2 = inlined_call_operand.vmem [shape: f32[42,20], index: 2, kind: input, shape index: {}]
  %s3 = inlined_call_operand.vmem [shape: f32[1,84], index: 3, kind: input, shape index: {}]
  %s4 = inlined_call_operand.vmem [shape: f32[6,72], index: 4, kind: input, shape index: {}]
  %s5 = inlined_call_operand.vmem [shape: f32[6,54], index: 5, kind: input, shape index: {}]
  %s6 = inlined_call_operand.vmem [shape: f32[6,54], index: 6, kind: input, shape index: {}]
  %s7 = inlined_call_operand.vmem [shape: f32[6,5], index: 7, kind: input, shape index: {}]
  %s8 = inlined_call_operand.vmem [shape: f32[2,6,20], index: 8, kind: output, shape index: {}]
  %s9 = sld [smem:[#allocation0]]
  $region42: #{social_stgcnn_forward.3} parent=0
    _
  %s11 = ssub.s32 1, %s9
  %s12 = scalar_select 0, %s11, %s9
  // Predicated region
  $region2: #{social_stgcnn_forward.3} parent=0 // pred_check
    _
  $region3: #{social_stgcnn_forward.3} parent=0 // pred_check_branch
    %14 = sbr.rel (0) target = $region5
  $region4: #{social_stgcnn_forward.3} parent=0 // pred_region
    _
  $region5: #{social_stgcnn_forward.3} parent=0 // pred_fallthru
    _
  // Predicated region
  $region6: #{social_stgcnn_forward.3} parent=0 // pred_check
    _
  $region7: #{social_stgcnn_forward.3} parent=0 // pred_check_branch
    %16 = sbr.rel (0) target = $region9
  $region8: #{social_stgcnn_forward.3} parent=0 // pred_region
    _
  $region9: #{social_stgcnn_forward.3} parent=0 // pred_fallthru
    _
  // Predicated region
  $region10: #{social_stgcnn_forward.3} parent=0 // pred_check
    _
  $region11: #{social_stgcnn_forward.3} parent=0 // pred_check_branch
    %18 = sbr.rel (0) target = $region13
  $region12: #{social_stgcnn_forward.3} parent=0 // pred_region
    _
  $region13: #{social_stgcnn_forward.3} parent=0 // pred_fallthru
    _
  // Predicated region
  $region14: #{social_stgcnn_forward.3} parent=0 // pred_check
    _
  $region15: #{social_stgcnn_forward.3} parent=0 // pred_check_branch
    %20 = sbr.rel (0) target = $region17
  $region16: #{social_stgcnn_forward.3} parent=0 // pred_region
    _
  $region17: #{social_stgcnn_forward.3} parent=0 // pred_fallthru
    _
  // Predicated region
  $region18: #{social_stgcnn_forward.3} parent=0 // pred_check
    _
  $region19: #{social_stgcnn_forward.3} parent=0 // pred_check_branch
    %22 = sbr.rel (0) target = $region21
  $region20: #{social_stgcnn_forward.3} parent=0 // pred_region
    _
  $region21: #{social_stgcnn_forward.3} parent=0 // pred_fallthru
    _
  // Predicated region
  $region22: #{social_stgcnn_forward.3} parent=0 // pred_check
    _
  $region23: #{social_stgcnn_forward.3} parent=0 // pred_check_branch
    %24 = sbr.rel (0) target = $region25
  $region24: #{social_stgcnn_forward.3} parent=0 // pred_region
    _
  $region25: #{social_stgcnn_forward.3} parent=0 // pred_fallthru
    _
  // Predicated region
  $region26: #{social_stgcnn_forward.3} parent=0 // pred_check
    _
  $region27: #{social_stgcnn_forward.3} parent=0 // pred_check_branch
    %26 = sbr.rel (0) target = $region29
  $region28: #{social_stgcnn_forward.3} parent=0 // pred_region
    _
  $region29: #{social_stgcnn_forward.3} parent=0 // pred_fallthru
    _
  // Predicated region
  $region30: #{social_stgcnn_forward.3} parent=0 // pred_check
    _
  $region31: #{social_stgcnn_forward.3} parent=0 // pred_check_branch
    %28 = sbr.rel (0) target = $region33
  $region32: #{social_stgcnn_forward.3} parent=0 // pred_region
    _
  $region33: #{social_stgcnn_forward.3} parent=0 // pred_fallthru
    _
  %v29 = vld [vmem:[%s1] sm:$0xff]
  %v30 = vld [vmem:[%s1 + $0x8] sm:$0xff]
  %v31 = vld [vmem:[%s1 + $0x10] sm:$0xf]
  %v32 = vld [vmem:[%s2] sm:$0xff]
  %v33 = vld [vmem:[%s2 + $0x8] sm:$0xff]
  %v34 = vld [vmem:[%s2 + $0x10] sm:$0xff]
  %v35 = vld [vmem:[%s2 + $0x18] sm:$0xff]
  %v36 = vld [vmem:[%s2 + $0x20] sm:$0xff]
  %v37 = vld [vmem:[%s2 + $0x28] sm:$0x3]
  %v38 = vld [vmem:[%s3] sm:$0x1]
  %v39 = vld [vmem:[%s7] sm:$0x3f]
  %vm40 = vcmask 56320
  %41 = vst.msk [vmem:[#allocation2] sm:$0xff] %vm40, 0.0
  %vm42 = vcmask 802520
  %43 = vst.msk [vmem:[#allocation2] sm:$0xff] %vm42, 0.0
  %v44 = vld [vmem:[%s0] sm:$0xff]
  %vm45 = vcmask 162816
  %v47 = vsel %vm45, %v44, 0
  %vm49 = vcmask 1043456
  %v51 = vsel %vm49, %v31, 0
  %53 = vmatprep.subr.mxu0 0.0
  %54 = vmatpush1.msra.mxu0 %v29
  %55 = vmatprep.subr.mxu0 0.0
  %56 = vmatpush1.msra.mxu0 %v30
  %57 = vmatprep.subr.mxu0 0.0
  %58 = vmatpush1.msra.mxu0 %v51
  %59 = vmatprep.subr.mxu0 0.0
  %60 = vmatpush1.msra.mxu0 0.0
  %61 = vmatprep.subr.mxu0 0.0
  %62 = vmatpush1.msra.mxu0 0.0
  %63 = vmatprep.subr.mxu0 0.0
  %64 = vmatpush1.msra.mxu0 0.0
  %65 = vmatprep.subr.mxu0 0.0
  %66 = vmatpush1.msra.mxu0 0.0
  %67 = vmatprep.subr.mxu0 0.0
  %68 = vmatpush1.msra.mxu0 0.0
  %69 = vmatprep.subr.mxu0 0.0
  %70 = vmatpush1.msra.mxu0 0.0
  %71 = vmatprep.subr.mxu0 0.0
  %72 = vmatpush1.msra.mxu0 0.0
  %73 = vmatprep.subr.mxu0 0.0
  %74 = vmatpush1.msra.mxu0 0.0
  %75 = vmatprep.subr.mxu0 0.0
  %76 = vmatpush1.msra.mxu0 0.0
  %77 = vmatprep.subr.mxu0 0.0
  %78 = vmatpush1.msra.mxu0 0.0
  %79 = vmatprep.subr.mxu0 0.0
  %80 = vmatpush1.msra.mxu0 0.0
  %81 = vmatprep.subr.mxu0 0.0
  %82 = vmatpush1.msra.mxu0 0.0
  %83 = vmatprep.subr.mxu0 0.0
  %84 = vmatpush1.msra.mxu0 0.0
  %85 = vmatprep.subr.mxu0 0.0
  %86 = vmatpush1.msra.mxu0 0.0
  %87 = vmatprep.subr.mxu0 0.0
  %88 = vmatpush1.msra.mxu0 0.0
  %89 = vmatprep.subr.mxu0 0.0
  %90 = vmatpush1.msra.mxu0 0.0
  %91 = vmatprep.subr.mxu0 0.0
  %92 = vmatpush1.msra.mxu0 0.0
  %93 = vmatprep.subr.mxu0 0.0
  %94 = vmatpush1.msra.mxu0 0.0
  %95 = vmatprep.subr.mxu0 0.0
  %96 = vmatpush1.msra.mxu0 0.0
  %97 = vmatprep.subr.mxu0 0.0
  %98 = vmatpush1.msra.mxu0 0.0
  %99 = vmatprep.subr.mxu0 0.0
  %100 = vmatpush1.msra.mxu0 0.0
  %101 = vmatprep.subr.mxu0 0.0
  %102 = vmatpush1.msra.mxu0 0.0
  %103 = vmatprep.subr.mxu0 0.0
  %104 = vmatpush1.msra.mxu0 0.0
  %105 = vmatprep.subr.mxu0 0.0
  %106 = vmatpush1.msra.mxu0 0.0
  %107 = vmatprep.subr.mxu0 0.0
  %108 = vmatpush1.msra.mxu0 0.0
  %109 = vmatprep.subr.mxu0 0.0
  %110 = vmatpush1.msra.mxu0 0.0
  %111 = vmatprep.subr.mxu0 0.0
  %112 = vmatpush1.msra.mxu0 0.0
  %113 = vmatprep.subr.mxu0 0.0
  %114 = vmatpush1.msra.mxu0 0.0
  %115 = vmatprep.subr.mxu0 0.0
  %116 = vmatpush1.msra.mxu0 0.0
  %117 = vmatprep.mubr.f32.mxu0 0.0
  %118 = vmatmul.mubr.f32.gmra.mrb[0].mxu0 %v47
  %v119 = vpop.f32.mrb[0].mxu0
  %v120 = vadd.f32 0.0, %v119
  %v121 = vpop.f32.mrb[0].mxu0
  %122 = vdwg.mxu0
  %124 = vrot.lane.b32.xlu0 %v120, 7
  %v125 = vpop.permute.xlu0 %124
  %vm127 = vcmask 400440
  %128 = vst.msk [vmem:[#allocation2] sm:$0xff] %vm127, %v125
  %s129 = scalar_lea.vmem %s0, 8
  %v130 = vld [vmem:[%s129] sm:$0xff]
  %v132 = vsel %vm45, %v130, 0
  %134 = vmatprep.subr.mxu0 0.0
  %135 = vmatpush1.msra.mxu0 %v29
  %136 = vmatprep.subr.mxu0 0.0
  %137 = vmatpush1.msra.mxu0 %v30
  %138 = vmatprep.subr.mxu0 0.0
  %139 = vmatpush1.msra.mxu0 %v51
  %140 = vmatprep.subr.mxu0 0.0
  %141 = vmatpush1.msra.mxu0 0.0
  %142 = vmatprep.subr.mxu0 0.0
  %143 = vmatpush1.msra.mxu0 0.0
  %144 = vmatprep.subr.mxu0 0.0
  %145 = vmatpush1.msra.mxu0 0.0
  %146 = vmatprep.subr.mxu0 0.0
  %147 = vmatpush1.msra.mxu0 0.0
  %148 = vmatprep.subr.mxu0 0.0
  %149 = vmatpush1.msra.mxu0 0.0
  %150 = vmatprep.subr.mxu0 0.0
  %151 = vmatpush1.msra.mxu0 0.0
  %152 = vmatprep.subr.mxu0 0.0
  %153 = vmatpush1.msra.mxu0 0.0
  %154 = vmatprep.subr.mxu0 0.0
  %155 = vmatpush1.msra.mxu0 0.0
  %156 = vmatprep.subr.mxu0 0.0
  %157 = vmatpush1.msra.mxu0 0.0
  %158 = vmatprep.subr.mxu0 0.0
  %159 = vmatpush1.msra.mxu0 0.0
  %160 = vmatprep.subr.mxu0 0.0
  %161 = vmatpush1.msra.mxu0 0.0
  %162 = vmatprep.subr.mxu0 0.0
  %163 = vmatpush1.msra.mxu0 0.0
  %164 = vmatprep.subr.mxu0 0.0
  %165 = vmatpush1.msra.mxu0 0.0
  %166 = vmatprep.subr.mxu0 0.0
  %167 = vmatpush1.msra.mxu0 0.0
  %168 = vmatprep.subr.mxu0 0.0
  %169 = vmatpush1.msra.mxu0 0.0
  %170 = vmatprep.subr.mxu0 0.0
  %171 = vmatpush1.msra.mxu0 0.0
  %172 = vmatprep.subr.mxu0 0.0
  %173 = vmatpush1.msra.mxu0 0.0
  %174 = vmatprep.subr.mxu0 0.0
  %175 = vmatpush1.msra.mxu0 0.0
  %176 = vmatprep.subr.mxu0 0.0
  %177 = vmatpush1.msra.mxu0 0.0
  %178 = vmatprep.subr.mxu0 0.0
  %179 = vmatpush1.msra.mxu0 0.0
  %180 = vmatprep.subr.mxu0 0.0
  %181 = vmatpush1.msra.mxu0 0.0
  %182 = vmatprep.subr.mxu0 0.0
  %183 = vmatpush1.msra.mxu0 0.0
  %184 = vmatprep.subr.mxu0 0.0
  %185 = vmatpush1.msra.mxu0 0.0
  %186 = vmatprep.subr.mxu0 0.0
  %187 = vmatpush1.msra.mxu0 0.0
  %188 = vmatprep.subr.mxu0 0.0
  %189 = vmatpush1.msra.mxu0 0.0
  %190 = vmatprep.subr.mxu0 0.0
  %191 = vmatpush1.msra.mxu0 0.0
  %192 = vmatprep.subr.mxu0 0.0
  %193 = vmatpush1.msra.mxu0 0.0
  %194 = vmatprep.subr.mxu0 0.0
  %195 = vmatpush1.msra.mxu0 0.0
  %196 = vmatprep.subr.mxu0 0.0
  %197 = vmatpush1.msra.mxu0 0.0
  %198 = vmatprep.mubr.f32.mxu0 0.0
  %199 = vmatmul.mubr.f32.gmra.mrb[0].mxu0 %v132
  %v200 = vpop.f32.mrb[0].mxu0
  %v201 = vadd.f32 0.0, %v200
  %v202 = vpop.f32.mrb[0].mxu0
  %203 = vdwg.mxu0
  %205 = vrot.lane.b32.xlu0 %v201, 49
  %v206 = vpop.permute.xlu0 %205
  %vm208 = vcmask 744840
  %209 = vst.msk [vmem:[#allocation2] sm:$0xff] %vm208, %v206
  %v210 = vld [vmem:[%s4] sm:$0x3f]
  %v211 = vld [vmem:[#allocation2] sm:$0xff]
  %213 = vrot.lane.b32.xlu0 %v211, 127
  %v214 = vpop.permute.xlu0 %213
  %216 = vrot.lane.b32.xlu0 %v211, 126
  %v217 = vpop.permute.xlu0 %216
  %219 = vrot.lane.b32.xlu0 %v211, 122
  %v220 = vpop.permute.xlu0 %219
  %222 = vrot.lane.b32.xlu0 %v211, 121
  %v223 = vpop.permute.xlu0 %222
  %225 = vrot.lane.b32.xlu0 %v211, 120
  %v226 = vpop.permute.xlu0 %225
  %228 = vrot.lane.b32.xlu0 %v211, 116
  %v229 = vpop.permute.xlu0 %228
  %231 = vrot.lane.b32.xlu0 %v211, 115
  %v232 = vpop.permute.xlu0 %231
  %234 = vrot.lane.b32.xlu0 %v211, 114
  %v235 = vpop.permute.xlu0 %234
  %238 = vset.pattern.permute.xlu0 0
  %239 = vperm.xlu0 %238, %v39
  %v240 = vpop.permute.xlu0 %239
  %vm242 = vcmask 588800
  %v244 = vsel %vm242, %v210, 0
  %246 = vmatprep.subr.mxu0 0.0
  %247 = vmatpush1.msra.mxu0 %v211
  %248 = vmatprep.subr.mxu0 0.0
  %249 = vmatpush1.msra.mxu0 %v214
  %250 = vmatprep.subr.mxu0 0.0
  %251 = vmatpush1.msra.mxu0 %v217
  %252 = vmatprep.subr.mxu0 0.0
  %253 = vmatpush1.msra.mxu0 %v220
  %254 = vmatprep.subr.mxu0 0.0
  %255 = vmatpush1.msra.mxu0 %v223
  %256 = vmatprep.subr.mxu0 0.0
  %257 = vmatpush1.msra.mxu0 %v226
  %258 = vmatprep.subr.mxu0 0.0
  %259 = vmatpush1.msra.mxu0 %v229
  %260 = vmatprep.subr.mxu0 0.0
  %261 = vmatpush1.msra.mxu0 %v232
  %262 = vmatprep.subr.mxu0 0.0
  %263 = vmatpush1.msra.mxu0 %v235
  %264 = vmatprep.subr.mxu0 0.0
  %265 = vmatpush1.msra.mxu0 0.0
  %266 = vmatprep.subr.mxu0 0.0
  %267 = vmatpush1.msra.mxu0 0.0
  %268 = vmatprep.subr.mxu0 0.0
  %269 = vmatpush1.msra.mxu0 0.0
  %270 = vmatprep.subr.mxu0 0.0
  %271 = vmatpush1.msra.mxu0 0.0
  %272 = vmatprep.subr.mxu0 0.0
  %273 = vmatpush1.msra.mxu0 0.0
  %274 = vmatprep.subr.mxu0 0.0
  %275 = vmatpush1.msra.mxu0 0.0
  %276 = vmatprep.subr.mxu0 0.0
  %277 = vmatpush1.msra.mxu0 0.0
  %278 = vmatprep.subr.mxu0 0.0
  %279 = vmatpush1.msra.mxu0 0.0
  %280 = vmatprep.subr.mxu0 0.0
  %281 = vmatpush1.msra.mxu0 0.0
  %282 = vmatprep.subr.mxu0 0.0
  %283 = vmatpush1.msra.mxu0 0.0
  %284 = vmatprep.subr.mxu0 0.0
  %285 = vmatpush1.msra.mxu0 0.0
  %286 = vmatprep.subr.mxu0 0.0
  %287 = vmatpush1.msra.mxu0 0.0
  %288 = vmatprep.subr.mxu0 0.0
  %289 = vmatpush1.msra.mxu0 0.0
  %290 = vmatprep.subr.mxu0 0.0
  %291 = vmatpush1.msra.mxu0 0.0
  %292 = vmatprep.subr.mxu0 0.0
  %293 = vmatpush1.msra.mxu0 0.0
  %294 = vmatprep.subr.mxu0 0.0
  %295 = vmatpush1.msra.mxu0 0.0
  %296 = vmatprep.subr.mxu0 0.0
  %297 = vmatpush1.msra.mxu0 0.0
  %298 = vmatprep.subr.mxu0 0.0
  %299 = vmatpush1.msra.mxu0 0.0
  %300 = vmatprep.subr.mxu0 0.0
  %301 = vmatpush1.msra.mxu0 0.0
  %302 = vmatprep.subr.mxu0 0.0
  %303 = vmatpush1.msra.mxu0 0.0
  %304 = vmatprep.subr.mxu0 0.0
  %305 = vmatpush1.msra.mxu0 0.0
  %306 = vmatprep.subr.mxu0 0.0
  %307 = vmatpush1.msra.mxu0 0.0
  %308 = vmatprep.subr.mxu0 0.0
  %309 = vmatpush1.msra.mxu0 0.0
  %310 = vmatprep.mubr.f32.mxu0 0.0
  %311 = vmatmul.mubr.f32.gmra.mrb[0].mxu0 %v244
  %v312 = vpop.f32.mrb[0].mxu0
  %v313 = vadd.f32 %v240, %v312
  %v314 = vpop.f32.mrb[0].mxu0
  %315 = vdwg.mxu0
  %vm316 = vcmp.ge.f32.partialorder %v313, 0.0
  %317 = vset.pattern.permute.xlu0 1
  %318 = vperm.xlu0 %317, %v39
  %v319 = vpop.permute.xlu0 %318
  %v321 = vmul.f32 %v319, %v313
  %v322 = vsel %vm316, %v313, %v321
  %v324 = vlaneseq
  %v325 = vshrl.u32 %v324, 7
  %v326 = vsub.s32 0, %v325
  %v327 = vrot.slane %v38, %v326
  %v329 = vmul.f32 %v322, %v327
  %331 = vrot.lane.b32.xlu0 %v329, 7
  %v332 = vpop.permute.xlu0 %331
  %vm334 = vcmask 742456
  %335 = vst.msk [vmem:[#allocation2] sm:$0x3f] %vm334, %v332
  %v336 = vld [vmem:[%s5] sm:$0x3f]
  %v337 = vld [vmem:[#allocation2] sm:$0x3f]
  %v339 = vrot.slane %v337, 2
  %340 = vrot.lane.b32.xlu0 %v339, 127
  %v341 = vpop.permute.xlu0 %340
  %v343 = vrot.slane %v337, 4
  %344 = vrot.lane.b32.xlu0 %v343, 126
  %v345 = vpop.permute.xlu0 %344
  %v347 = vrot.slane %v337, 6
  %348 = vrot.lane.b32.xlu0 %v347, 122
  %v349 = vpop.permute.xlu0 %348
  %351 = vrot.lane.b32.xlu0 %v337, 121
  %v352 = vpop.permute.xlu0 %351
  %354 = vrot.lane.b32.xlu0 %v339, 120
  %v355 = vpop.permute.xlu0 %354
  %357 = vrot.lane.b32.xlu0 %v343, 116
  %v358 = vpop.permute.xlu0 %357
  %360 = vrot.lane.b32.xlu0 %v347, 115
  %v361 = vpop.permute.xlu0 %360
  %363 = vrot.lane.b32.xlu0 %v337, 114
  %v364 = vpop.permute.xlu0 %363
  %vm365 = vcmask 1045504
  %v366 = vsel %vm365, %v337, %v341
  %v367 = vsel %vm49, %v341, %v345
  %vm368 = vcmask 1041408
  %v369 = vsel %vm368, %v345, %v349
  %v370 = vsel %vm365, %v352, %v355
  %v371 = vsel %vm49, %v355, %v358
  %v372 = vsel %vm368, %v358, %v361
  %373 = vset.pattern.permute.xlu0 2
  %374 = vperm.xlu0 %373, %v39
  %v375 = vpop.permute.xlu0 %374
  %vm377 = vcmask 441344
  %v379 = vsel %vm377, %v336, 0
  %v381 = vsel %vm365, %v364, 0
  %383 = vmatprep.subr.mxu0 0.0
  %384 = vmatpush1.msra.mxu0 %v366
  %385 = vmatprep.subr.mxu0 0.0
  %386 = vmatpush1.msra.mxu0 %v367
  %387 = vmatprep.subr.mxu0 0.0
  %388 = vmatpush1.msra.mxu0 %v369
  %389 = vmatprep.subr.mxu0 0.0
  %390 = vmatpush1.msra.mxu0 %v370
  %391 = vmatprep.subr.mxu0 0.0
  %392 = vmatpush1.msra.mxu0 %v371
  %393 = vmatprep.subr.mxu0 0.0
  %394 = vmatpush1.msra.mxu0 %v372
  %395 = vmatprep.subr.mxu0 0.0
  %396 = vmatpush1.msra.mxu0 %v381
  %397 = vmatprep.subr.mxu0 0.0
  %398 = vmatpush1.msra.mxu0 0.0
  %399 = vmatprep.subr.mxu0 0.0
  %400 = vmatpush1.msra.mxu0 0.0
  %401 = vmatprep.subr.mxu0 0.0
  %402 = vmatpush1.msra.mxu0 0.0
  %403 = vmatprep.subr.mxu0 0.0
  %404 = vmatpush1.msra.mxu0 0.0
  %405 = vmatprep.subr.mxu0 0.0
  %406 = vmatpush1.msra.mxu0 0.0
  %407 = vmatprep.subr.mxu0 0.0
  %408 = vmatpush1.msra.mxu0 0.0
  %409 = vmatprep.subr.mxu0 0.0
  %410 = vmatpush1.msra.mxu0 0.0
  %411 = vmatprep.subr.mxu0 0.0
  %412 = vmatpush1.msra.mxu0 0.0
  %413 = vmatprep.subr.mxu0 0.0
  %414 = vmatpush1.msra.mxu0 0.0
  %415 = vmatprep.subr.mxu0 0.0
  %416 = vmatpush1.msra.mxu0 0.0
  %417 = vmatprep.subr.mxu0 0.0
  %418 = vmatpush1.msra.mxu0 0.0
  %419 = vmatprep.subr.mxu0 0.0
  %420 = vmatpush1.msra.mxu0 0.0
  %421 = vmatprep.subr.mxu0 0.0
  %422 = vmatpush1.msra.mxu0 0.0
  %423 = vmatprep.subr.mxu0 0.0
  %424 = vmatpush1.msra.mxu0 0.0
  %425 = vmatprep.subr.mxu0 0.0
  %426 = vmatpush1.msra.mxu0 0.0
  %427 = vmatprep.subr.mxu0 0.0
  %428 = vmatpush1.msra.mxu0 0.0
  %429 = vmatprep.subr.mxu0 0.0
  %430 = vmatpush1.msra.mxu0 0.0
  %431 = vmatprep.subr.mxu0 0.0
  %432 = vmatpush1.msra.mxu0 0.0
  %433 = vmatprep.subr.mxu0 0.0
  %434 = vmatpush1.msra.mxu0 0.0
  %435 = vmatprep.subr.mxu0 0.0
  %436 = vmatpush1.msra.mxu0 0.0
  %437 = vmatprep.subr.mxu0 0.0
  %438 = vmatpush1.msra.mxu0 0.0
  %439 = vmatprep.subr.mxu0 0.0
  %440 = vmatpush1.msra.mxu0 0.0
  %441 = vmatprep.subr.mxu0 0.0
  %442 = vmatpush1.msra.mxu0 0.0
  %443 = vmatprep.subr.mxu0 0.0
  %444 = vmatpush1.msra.mxu0 0.0
  %445 = vmatprep.subr.mxu0 0.0
  %446 = vmatpush1.msra.mxu0 0.0
  %447 = vmatprep.mubr.f32.mxu0 0.0
  %448 = vmatmul.mubr.f32.gmra.mrb[0].mxu0 %v379
  %v449 = vpop.f32.mrb[0].mxu0
  %v450 = vadd.f32 %v375, %v449
  %v451 = vpop.f32.mrb[0].mxu0
  %452 = vdwg.mxu0
  %vm453 = vcmp.ge.f32.partialorder %v450, 0.0
  %454 = vset.pattern.permute.xlu0 3
  %455 = vperm.xlu0 %454, %v39
  %v456 = vpop.permute.xlu0 %455
  %v458 = vmul.f32 %v456, %v450
  %v459 = vsel %vm453, %v450, %v458
  %v460 = vmul.f32 %v459, %v327
  %v461 = vadd.f32 %v329, %v460
  %463 = vrot.lane.b32.xlu0 %v461, 7
  %v464 = vpop.permute.xlu0 %463
  %466 = vst.msk [vmem:[#allocation2] sm:$0x3f] %vm334, %v464
  %v467 = vld [vmem:[%s6] sm:$0x3f]
  %v468 = vld [vmem:[#allocation2] sm:$0x3f]
  %v470 = vrot.slane %v468, 2
  %471 = vrot.lane.b32.xlu0 %v470, 127
  %v472 = vpop.permute.xlu0 %471
  %v474 = vrot.slane %v468, 4
  %475 = vrot.lane.b32.xlu0 %v474, 126
  %v476 = vpop.permute.xlu0 %475
  %v478 = vrot.slane %v468, 6
  %479 = vrot.lane.b32.xlu0 %v478, 122
  %v480 = vpop.permute.xlu0 %479
  %482 = vrot.lane.b32.xlu0 %v468, 121
  %v483 = vpop.permute.xlu0 %482
  %485 = vrot.lane.b32.xlu0 %v470, 120
  %v486 = vpop.permute.xlu0 %485
  %488 = vrot.lane.b32.xlu0 %v474, 116
  %v489 = vpop.permute.xlu0 %488
  %491 = vrot.lane.b32.xlu0 %v478, 115
  %v492 = vpop.permute.xlu0 %491
  %494 = vrot.lane.b32.xlu0 %v468, 114
  %v495 = vpop.permute.xlu0 %494
  %v496 = vsel %vm365, %v468, %v472
  %v497 = vsel %vm49, %v472, %v476
  %v498 = vsel %vm368, %v476, %v480
  %v499 = vsel %vm365, %v483, %v486
  %v500 = vsel %vm49, %v486, %v489
  %v501 = vsel %vm368, %v489, %v492
  %502 = vset.pattern.permute.xlu0 4
  %503 = vperm.xlu0 %502, %v39
  %v504 = vpop.permute.xlu0 %503
  %v507 = vsel %vm377, %v467, 0
  %v509 = vsel %vm365, %v495, 0
  %511 = vmatprep.subr.mxu0 0.0
  %512 = vmatpush1.msra.mxu0 %v496
  %513 = vmatprep.subr.mxu0 0.0
  %514 = vmatpush1.msra.mxu0 %v497
  %515 = vmatprep.subr.mxu0 0.0
  %516 = vmatpush1.msra.mxu0 %v498
  %517 = vmatprep.subr.mxu0 0.0
  %518 = vmatpush1.msra.mxu0 %v499
  %519 = vmatprep.subr.mxu0 0.0
  %520 = vmatpush1.msra.mxu0 %v500
  %521 = vmatprep.subr.mxu0 0.0
  %522 = vmatpush1.msra.mxu0 %v501
  %523 = vmatprep.subr.mxu0 0.0
  %524 = vmatpush1.msra.mxu0 %v509
  %525 = vmatprep.subr.mxu0 0.0
  %526 = vmatpush1.msra.mxu0 0.0
  %527 = vmatprep.subr.mxu0 0.0
  %528 = vmatpush1.msra.mxu0 0.0
  %529 = vmatprep.subr.mxu0 0.0
  %530 = vmatpush1.msra.mxu0 0.0
  %531 = vmatprep.subr.mxu0 0.0
  %532 = vmatpush1.msra.mxu0 0.0
  %533 = vmatprep.subr.mxu0 0.0
  %534 = vmatpush1.msra.mxu0 0.0
  %535 = vmatprep.subr.mxu0 0.0
  %536 = vmatpush1.msra.mxu0 0.0
  %537 = vmatprep.subr.mxu0 0.0
  %538 = vmatpush1.msra.mxu0 0.0
  %539 = vmatprep.subr.mxu0 0.0
  %540 = vmatpush1.msra.mxu0 0.0
  %541 = vmatprep.subr.mxu0 0.0
  %542 = vmatpush1.msra.mxu0 0.0
  %543 = vmatprep.subr.mxu0 0.0
  %544 = vmatpush1.msra.mxu0 0.0
  %545 = vmatprep.subr.mxu0 0.0
  %546 = vmatpush1.msra.mxu0 0.0
  %547 = vmatprep.subr.mxu0 0.0
  %548 = vmatpush1.msra.mxu0 0.0
  %549 = vmatprep.subr.mxu0 0.0
  %550 = vmatpush1.msra.mxu0 0.0
  %551 = vmatprep.subr.mxu0 0.0
  %552 = vmatpush1.msra.mxu0 0.0
  %553 = vmatprep.subr.mxu0 0.0
  %554 = vmatpush1.msra.mxu0 0.0
  %555 = vmatprep.subr.mxu0 0.0
  %556 = vmatpush1.msra.mxu0 0.0
  %557 = vmatprep.subr.mxu0 0.0
  %558 = vmatpush1.msra.mxu0 0.0
  %559 = vmatprep.subr.mxu0 0.0
  %560 = vmatpush1.msra.mxu0 0.0
  %561 = vmatprep.subr.mxu0 0.0
  %562 = vmatpush1.msra.mxu0 0.0
  %563 = vmatprep.subr.mxu0 0.0
  %564 = vmatpush1.msra.mxu0 0.0
  %565 = vmatprep.subr.mxu0 0.0
  %566 = vmatpush1.msra.mxu0 0.0
  %567 = vmatprep.subr.mxu0 0.0
  %568 = vmatpush1.msra.mxu0 0.0
  %569 = vmatprep.subr.mxu0 0.0
  %570 = vmatpush1.msra.mxu0 0.0
  %571 = vmatprep.subr.mxu0 0.0
  %572 = vmatpush1.msra.mxu0 0.0
  %573 = vmatprep.subr.mxu0 0.0
  %574 = vmatpush1.msra.mxu0 0.0
  %575 = vmatprep.mubr.f32.mxu0 0.0
  %576 = vmatmul.mubr.f32.gmra.mrb[0].mxu0 %v507
  %v577 = vpop.f32.mrb[0].mxu0
  %v578 = vadd.f32 %v504, %v577
  %v579 = vpop.f32.mrb[0].mxu0
  %580 = vdwg.mxu0
  %vm581 = vcmask 343040
  %v583 = vsel %vm581, %v578, 0
  %v586 = vsel %vm368, %v37, 0
  %588 = vmatprep.subr.mxu0 0.0
  %589 = vmatpush1.msra.mxu0 %v32
  %590 = vmatprep.subr.mxu0 0.0
  %591 = vmatpush1.msra.mxu0 %v33
  %592 = vmatprep.subr.mxu0 0.0
  %593 = vmatpush1.msra.mxu0 %v34
  %594 = vmatprep.subr.mxu0 0.0
  %595 = vmatpush1.msra.mxu0 %v35
  %596 = vmatprep.subr.mxu0 0.0
  %597 = vmatpush1.msra.mxu0 %v36
  %598 = vmatprep.subr.mxu0 0.0
  %599 = vmatpush1.msra.mxu0 %v586
  %600 = vmatprep.subr.mxu0 0.0
  %601 = vmatpush1.msra.mxu0 0.0
  %602 = vmatprep.subr.mxu0 0.0
  %603 = vmatpush1.msra.mxu0 0.0
  %604 = vmatprep.subr.mxu0 0.0
  %605 = vmatpush1.msra.mxu0 0.0
  %606 = vmatprep.subr.mxu0 0.0
  %607 = vmatpush1.msra.mxu0 0.0
  %608 = vmatprep.subr.mxu0 0.0
  %609 = vmatpush1.msra.mxu0 0.0
  %610 = vmatprep.subr.mxu0 0.0
  %611 = vmatpush1.msra.mxu0 0.0
  %612 = vmatprep.subr.mxu0 0.0
  %613 = vmatpush1.msra.mxu0 0.0
  %614 = vmatprep.subr.mxu0 0.0
  %615 = vmatpush1.msra.mxu0 0.0
  %616 = vmatprep.subr.mxu0 0.0
  %617 = vmatpush1.msra.mxu0 0.0
  %618 = vmatprep.subr.mxu0 0.0
  %619 = vmatpush1.msra.mxu0 0.0
  %620 = vmatprep.subr.mxu0 0.0
  %621 = vmatpush1.msra.mxu0 0.0
  %622 = vmatprep.subr.mxu0 0.0
  %623 = vmatpush1.msra.mxu0 0.0
  %624 = vmatprep.subr.mxu0 0.0
  %625 = vmatpush1.msra.mxu0 0.0
  %626 = vmatprep.subr.mxu0 0.0
  %627 = vmatpush1.msra.mxu0 0.0
  %628 = vmatprep.subr.mxu0 0.0
  %629 = vmatpush1.msra.mxu0 0.0
  %630 = vmatprep.subr.mxu0 0.0
  %631 = vmatpush1.msra.mxu0 0.0
  %632 = vmatprep.subr.mxu0 0.0
  %633 = vmatpush1.msra.mxu0 0.0
  %634 = vmatprep.subr.mxu0 0.0
  %635 = vmatpush1.msra.mxu0 0.0
  %636 = vmatprep.subr.mxu0 0.0
  %637 = vmatpush1.msra.mxu0 0.0
  %638 = vmatprep.subr.mxu0 0.0
  %639 = vmatpush1.msra.mxu0 0.0
  %640 = vmatprep.subr.mxu0 0.0
  %641 = vmatpush1.msra.mxu0 0.0
  %642 = vmatprep.subr.mxu0 0.0
  %643 = vmatpush1.msra.mxu0 0.0
  %644 = vmatprep.subr.mxu0 0.0
  %645 = vmatpush1.msra.mxu0 0.0
  %646 = vmatprep.subr.mxu0 0.0
  %647 = vmatpush1.msra.mxu0 0.0
  %648 = vmatprep.subr.mxu0 0.0
  %649 = vmatpush1.msra.mxu0 0.0
  %650 = vmatprep.subr.mxu0 0.0
  %651 = vmatpush1.msra.mxu0 0.0
  %652 = vmatprep.mubr.f32.mxu0 0.0
  %653 = vmatmul.mubr.f32.gmra.mrb[0].mxu0 %v583
  %v654 = vpop.f32.mrb[0].mxu0
  %v655 = vadd.f32 0.0, %v654
  %v656 = vpop.f32.mrb[0].mxu0
  %657 = vdwg.mxu0
  %vm658 = vcmask 160768
  %659 = vst.msk [vmem:[%s8] sm:$0x3f] %vm658, %v655
  %660 = vrot.lane.b32.xlu0 %v578, 86
  %v661 = vpop.permute.xlu0 %660
  %v662 = vsel %vm581, %v661, 0
  %664 = vmatprep.subr.mxu0 0.0
  %665 = vmatpush1.msra.mxu0 %v32
  %666 = vmatprep.subr.mxu0 0.0
  %667 = vmatpush1.msra.mxu0 %v33
  %668 = vmatprep.subr.mxu0 0.0
  %669 = vmatpush1.msra.mxu0 %v34
  %670 = vmatprep.subr.mxu0 0.0
  %671 = vmatpush1.msra.mxu0 %v35
  %672 = vmatprep.subr.mxu0 0.0
  %673 = vmatpush1.msra.mxu0 %v36
  %674 = vmatprep.subr.mxu0 0.0
  %675 = vmatpush1.msra.mxu0 %v586
  %676 = vmatprep.subr.mxu0 0.0
  %677 = vmatpush1.msra.mxu0 0.0
  %678 = vmatprep.subr.mxu0 0.0
  %679 = vmatpush1.msra.mxu0 0.0
  %680 = vmatprep.subr.mxu0 0.0
  %681 = vmatpush1.msra.mxu0 0.0
  %682 = vmatprep.subr.mxu0 0.0
  %683 = vmatpush1.msra.mxu0 0.0
  %684 = vmatprep.subr.mxu0 0.0
  %685 = vmatpush1.msra.mxu0 0.0
  %686 = vmatprep.subr.mxu0 0.0
  %687 = vmatpush1.msra.mxu0 0.0
  %688 = vmatprep.subr.mxu0 0.0
  %689 = vmatpush1.msra.mxu0 0.0
  %690 = vmatprep.subr.mxu0 0.0
  %691 = vmatpush1.msra.mxu0 0.0
  %692 = vmatprep.subr.mxu0 0.0
  %693 = vmatpush1.msra.mxu0 0.0
  %694 = vmatprep.subr.mxu0 0.0
  %695 = vmatpush1.msra.mxu0 0.0
  %696 = vmatprep.subr.mxu0 0.0
  %697 = vmatpush1.msra.mxu0 0.0
  %698 = vmatprep.subr.mxu0 0.0
  %699 = vmatpush1.msra.mxu0 0.0
  %700 = vmatprep.subr.mxu0 0.0
  %701 = vmatpush1.msra.mxu0 0.0
  %702 = vmatprep.subr.mxu0 0.0
  %703 = vmatpush1.msra.mxu0 0.0
  %704 = vmatprep.subr.mxu0 0.0
  %705 = vmatpush1.msra.mxu0 0.0
  %706 = vmatprep.subr.mxu0 0.0
  %707 = vmatpush1.msra.mxu0 0.0
  %708 = vmatprep.subr.mxu0 0.0
  %709 = vmatpush1.msra.mxu0 0.0
  %710 = vmatprep.subr.mxu0 0.0
  %711 = vmatpush1.msra.mxu0 0.0
  %712 = vmatprep.subr.mxu0 0.0
  %713 = vmatpush1.msra.mxu0 0.0
  %714 = vmatprep.subr.mxu0 0.0
  %715 = vmatpush1.msra.mxu0 0.0
  %716 = vmatprep.subr.mxu0 0.0
  %717 = vmatpush1.msra.mxu0 0.0
  %718 = vmatprep.subr.mxu0 0.0
  %719 = vmatpush1.msra.mxu0 0.0
  %720 = vmatprep.subr.mxu0 0.0
  %721 = vmatpush1.msra.mxu0 0.0
  %722 = vmatprep.subr.mxu0 0.0
  %723 = vmatpush1.msra.mxu0 0.0
  %724 = vmatprep.subr.mxu0 0.0
  %725 = vmatpush1.msra.mxu0 0.0
  %726 = vmatprep.subr.mxu0 0.0
  %727 = vmatpush1.msra.mxu0 0.0
  %728 = vmatprep.mubr.f32.mxu0 0.0
  %729 = vmatmul.mubr.f32.gmra.mrb[0].mxu0 %v662
  %v730 = vpop.f32.mrb[0].mxu0
  %v731 = vadd.f32 0.0, %v730
  %v732 = vpop.f32.mrb[0].mxu0
  %733 = vdwg.mxu0
  %s734 = scalar_lea.vmem %s8, 8
  %735 = vst.msk [vmem:[%s734] sm:$0x3f] %vm658, %v731
  // Predicated region
  $region34: #{social_stgcnn_forward.3} parent=0 // pred_check
    _
  $region35: #{social_stgcnn_forward.3} parent=0 // pred_check_branch
    %737 = sbr.rel (0) target = $region37
  $region36: #{social_stgcnn_forward.3} parent=0 // pred_region
    _
  $region37: #{social_stgcnn_forward.3} parent=0 // pred_fallthru
    _
  // Predicated region
  $region38: #{social_stgcnn_forward.3} parent=0 // pred_check
    _
  $region39: #{social_stgcnn_forward.3} parent=0 // pred_check_branch
    %739 = sbr.rel (0) target = $region41
  $region40: #{social_stgcnn_forward.3} parent=0 // pred_region
    _
  $region41: #{social_stgcnn_forward.3} parent=0 // pred_fallthru
    _

// kernel: social_stgcnn_forward.2
$region0: #{social_stgcnn_forward.2}
  #allocation0 [shape = 'u32[]', space=smem, size = 0x4, offset = 0x4, fixed_abs, tag = 'smem constant byte address 0x4 - core index']
  #allocation1 [shape = 'u32[144,128]{1,0:T(1,128)}', space=vmem, size = 0x12000, scoped, tag = 'internal scratch']
  #allocation2 [shape = 'f32[2,80]{1,0:T(2,128)}', space=vmem, size = 0x400, scoped, tag = 'scratch operand']
  #allocation3 [shape = 'f32[5,88]{1,0:T(8,128)}', space=vmem, size = 0x1000, scoped, tag = 'scratch operand']
  %s0 = inlined_call_operand.vmem [shape: f32[2,2,32], index: 0, kind: input, shape index: {}]
  %s1 = inlined_call_operand.vmem [shape: f32[80,80], index: 1, kind: input, shape index: {}]
  %s2 = inlined_call_operand.vmem [shape: f32[1,80], index: 2, kind: input, shape index: {}]
  %s3 = inlined_call_operand.vmem [shape: f32[5,2], index: 3, kind: input, shape index: {}]
  %s4 = inlined_call_operand.vmem [shape: f32[5,15], index: 4, kind: input, shape index: {}]
  %s5 = inlined_call_operand.vmem [shape: f32[5,2], index: 5, kind: input, shape index: {}]
  %s6 = inlined_call_operand.vmem [shape: f32[5,5], index: 6, kind: input, shape index: {}]
  %s7 = inlined_call_operand.vmem [shape: f32[5,15], index: 7, kind: input, shape index: {}]
  %s8 = inlined_call_operand.vmem [shape: f32[5,11], index: 8, kind: input, shape index: {}]
  %s9 = inlined_call_operand.vmem [shape: f32[2,5,32], index: 9, kind: output, shape index: {}]
  %s10 = sld [smem:[#allocation0]]
  $region46: #{social_stgcnn_forward.2} parent=0
    _
  %s12 = ssub.s32 1, %s10
  %s13 = scalar_select 0, %s12, %s10
  // Predicated region
  $region2: #{social_stgcnn_forward.2} parent=0 // pred_check
    _
  $region3: #{social_stgcnn_forward.2} parent=0 // pred_check_branch
    %15 = sbr.rel (0) target = $region5
  $region4: #{social_stgcnn_forward.2} parent=0 // pred_region
    _
  $region5: #{social_stgcnn_forward.2} parent=0 // pred_fallthru
    _
  // Predicated region
  $region6: #{social_stgcnn_forward.2} parent=0 // pred_check
    _
  $region7: #{social_stgcnn_forward.2} parent=0 // pred_check_branch
    %17 = sbr.rel (0) target = $region9
  $region8: #{social_stgcnn_forward.2} parent=0 // pred_region
    _
  $region9: #{social_stgcnn_forward.2} parent=0 // pred_fallthru
    _
  // Predicated region
  $region10: #{social_stgcnn_forward.2} parent=0 // pred_check
    _
  $region11: #{social_stgcnn_forward.2} parent=0 // pred_check_branch
    %19 = sbr.rel (0) target = $region13
  $region12: #{social_stgcnn_forward.2} parent=0 // pred_region
    _
  $region13: #{social_stgcnn_forward.2} parent=0 // pred_fallthru
    _
  // Predicated region
  $region14: #{social_stgcnn_forward.2} parent=0 // pred_check
    _
  $region15: #{social_stgcnn_forward.2} parent=0 // pred_check_branch
    %21 = sbr.rel (0) target = $region17
  $region16: #{social_stgcnn_forward.2} parent=0 // pred_region
    _
  $region17: #{social_stgcnn_forward.2} parent=0 // pred_fallthru
    _
  // Predicated region
  $region18: #{social_stgcnn_forward.2} parent=0 // pred_check
    _
  $region19: #{social_stgcnn_forward.2} parent=0 // pred_check_branch
    %23 = sbr.rel (0) target = $region21
  $region20: #{social_stgcnn_forward.2} parent=0 // pred_region
    _
  $region21: #{social_stgcnn_forward.2} parent=0 // pred_fallthru
    _
  // Predicated region
  $region22: #{social_stgcnn_forward.2} parent=0 // pred_check
    _
  $region23: #{social_stgcnn_forward.2} parent=0 // pred_check_branch
    %25 = sbr.rel (0) target = $region25
  $region24: #{social_stgcnn_forward.2} parent=0 // pred_region
    _
  $region25: #{social_stgcnn_forward.2} parent=0 // pred_fallthru
    _
  // Predicated region
  $region26: #{social_stgcnn_forward.2} parent=0 // pred_check
    _
  $region27: #{social_stgcnn_forward.2} parent=0 // pred_check_branch
    %27 = sbr.rel (0) target = $region29
  $region28: #{social_stgcnn_forward.2} parent=0 // pred_region
    _
  $region29: #{social_stgcnn_forward.2} parent=0 // pred_fallthru
    _
  // Predicated region
  $region30: #{social_stgcnn_forward.2} parent=0 // pred_check
    _
  $region31: #{social_stgcnn_forward.2} parent=0 // pred_check_branch
    %29 = sbr.rel (0) target = $region33
  $region32: #{social_stgcnn_forward.2} parent=0 // pred_region
    _
  $region33: #{social_stgcnn_forward.2} parent=0 // pred_fallthru
    _
  // Predicated region
  $region34: #{social_stgcnn_forward.2} parent=0 // pred_check
    _
  $region35: #{social_stgcnn_forward.2} parent=0 // pred_check_branch
    %31 = sbr.rel (0) target = $region37
  $region36: #{social_stgcnn_forward.2} parent=0 // pred_region
    _
  $region37: #{social_stgcnn_forward.2} parent=0 // pred_fallthru
    _
  %v32 = vld [vmem:[%s1] sm:$0xff]
  %v33 = vld [vmem:[%s1 + $0x8] sm:$0xff]
  %v34 = vld [vmem:[%s1 + $0x10] sm:$0xff]
  %v35 = vld [vmem:[%s1 + $0x18] sm:$0xff]
  %v36 = vld [vmem:[%s1 + $0x20] sm:$0xff]
  %v37 = vld [vmem:[%s1 + $0x28] sm:$0xff]
  %v38 = vld [vmem:[%s1 + $0x30] sm:$0xff]
  %v39 = vld [vmem:[%s1 + $0x38] sm:$0xff]
  %v40 = vld [vmem:[%s1 + $0x40] sm:$0xff]
  %v41 = vld [vmem:[%s1 + $0x48] sm:$0xff]
  %v42 = vld [vmem:[%s2] sm:$0x1]
  %v43 = vld [vmem:[%s8] sm:$0x1f]
  %vm44 = vcmask 648192
  %45 = vst.msk [vmem:[#allocation2] sm:$0x3] %vm44, 0.0
  %v46 = vld [vmem:[%s0] sm:$0x3]
  %48 = vrot.lane.b32.xlu0 %v46, 4
  %v49 = vpop.permute.xlu0 %48
  %vm51 = vcmask 287776
  %52 = vst.msk [vmem:[#allocation2] sm:$0x3] %vm51, %v49
  %s53 = scalar_lea.vmem %s0, 2
  %v54 = vld [vmem:[%s53] sm:$0x3]
  %56 = vrot.lane.b32.xlu0 %v54, 44
  %v57 = vpop.permute.xlu0 %56
  %vm59 = vcmask 615776
  %60 = vst.msk [vmem:[#allocation2] sm:$0x3] %vm59, %v57
  %v61 = vld [vmem:[#allocation2] sm:$0x3]
  %vm62 = vcmask 28672
  %63 = vst.msk [vmem:[#allocation3] sm:$0x1f] %vm62, 0.0
  %vm64 = vcmask 717472
  %65 = vst.msk [vmem:[#allocation3] sm:$0x1f] %vm64, 0.0
  %v66 = vld [vmem:[%s3] sm:$0x1f]
  %v67 = vld [vmem:[%s4] sm:$0x1f]
  %69 = vset.pattern.permute.xlu0 0
  %70 = vperm.xlu0 %69, %v43
  %v71 = vpop.permute.xlu0 %70
  %vm73 = vcmask 15360
  %v75 = vsel %vm73, %v66, 0
  %vm77 = vcmask 1041408
  %v79 = vsel %vm77, %v61, 0
  %81 = vmatprep.subr.mxu0 0.0
  %82 = vmatpush1.msra.mxu0 %v79
  %83 = vmatprep.subr.mxu0 0.0
  %84 = vmatpush1.msra.mxu0 0.0
  %85 = vmatprep.subr.mxu0 0.0
  %86 = vmatpush1.msra.mxu0 0.0
  %87 = vmatprep.subr.mxu0 0.0
  %88 = vmatpush1.msra.mxu0 0.0
  %89 = vmatprep.subr.mxu0 0.0
  %90 = vmatpush1.msra.mxu0 0.0
  %91 = vmatprep.subr.mxu0 0.0
  %92 = vmatpush1.msra.mxu0 0.0
  %93 = vmatprep.subr.mxu0 0.0
  %94 = vmatpush1.msra.mxu0 0.0
  %95 = vmatprep.subr.mxu0 0.0
  %96 = vmatpush1.msra.mxu0 0.0
  %97 = vmatprep.subr.mxu0 0.0
  %98 = vmatpush1.msra.mxu0 0.0
  %99 = vmatprep.subr.mxu0 0.0
  %100 = vmatpush1.msra.mxu0 0.0
  %101 = vmatprep.subr.mxu0 0.0
  %102 = vmatpush1.msra.mxu0 0.0
  %103 = vmatprep.subr.mxu0 0.0
  %104 = vmatpush1.msra.mxu0 0.0
  %105 = vmatprep.subr.mxu0 0.0
  %106 = vmatpush1.msra.mxu0 0.0
  %107 = vmatprep.subr.mxu0 0.0
  %108 = vmatpush1.msra.mxu0 0.0
  %109 = vmatprep.subr.mxu0 0.0
  %110 = vmatpush1.msra.mxu0 0.0
  %111 = vmatprep.subr.mxu0 0.0
  %112 = vmatpush1.msra.mxu0 0.0
  %113 = vmatprep.subr.mxu0 0.0
  %114 = vmatpush1.msra.mxu0 0.0
  %115 = vmatprep.subr.mxu0 0.0
  %116 = vmatpush1.msra.mxu0 0.0
  %117 = vmatprep.subr.mxu0 0.0
  %118 = vmatpush1.msra.mxu0 0.0
  %119 = vmatprep.subr.mxu0 0.0
  %120 = vmatpush1.msra.mxu0 0.0
  %121 = vmatprep.subr.mxu0 0.0
  %122 = vmatpush1.msra.mxu0 0.0
  %123 = vmatprep.subr.mxu0 0.0
  %124 = vmatpush1.msra.mxu0 0.0
  %125 = vmatprep.subr.mxu0 0.0
  %126 = vmatpush1.msra.mxu0 0.0
  %127 = vmatprep.subr.mxu0 0.0
  %128 = vmatpush1.msra.mxu0 0.0
  %129 = vmatprep.subr.mxu0 0.0
  %130 = vmatpush1.msra.mxu0 0.0
  %131 = vmatprep.subr.mxu0 0.0
  %132 = vmatpush1.msra.mxu0 0.0
  %133 = vmatprep.subr.mxu0 0.0
  %134 = vmatpush1.msra.mxu0 0.0
  %135 = vmatprep.subr.mxu0 0.0
  %136 = vmatpush1.msra.mxu0 0.0
  %137 = vmatprep.subr.mxu0 0.0
  %138 = vmatpush1.msra.mxu0 0.0
  %139 = vmatprep.subr.mxu0 0.0
  %140 = vmatpush1.msra.mxu0 0.0
  %141 = vmatprep.subr.mxu0 0.0
  %142 = vmatpush1.msra.mxu0 0.0
  %143 = vmatprep.subr.mxu0 0.0
  %144 = vmatpush1.msra.mxu0 0.0
  %145 = vmatprep.mubr.f32.mxu0 0.0
  %146 = vmatmul.mubr.f32.gmra.mrb[0].mxu0 %v75
  %v147 = vpop.f32.mrb[0].mxu0
  %v148 = vadd.f32 %v71, %v147
  %v149 = vpop.f32.mrb[0].mxu0
  %150 = vdwg.mxu0
  %151 = vset.pattern.permute.xlu0 1
  %152 = vperm.xlu0 %151, %v43
  %v153 = vpop.permute.xlu0 %152
  %vm155 = vcmask 654336
  %v157 = vsel %vm155, %v148, 0
  %159 = vmatprep.subr.mxu0 0.0
  %160 = vmatpush1.msra.mxu0 %v32
  %161 = vmatprep.subr.mxu0 0.0
  %162 = vmatpush1.msra.mxu0 %v33
  %163 = vmatprep.subr.mxu0 0.0
  %164 = vmatpush1.msra.mxu0 %v34
  %165 = vmatprep.subr.mxu0 0.0
  %166 = vmatpush1.msra.mxu0 %v35
  %167 = vmatprep.subr.mxu0 0.0
  %168 = vmatpush1.msra.mxu0 %v36
  %169 = vmatprep.subr.mxu0 0.0
  %170 = vmatpush1.msra.mxu0 %v37
  %171 = vmatprep.subr.mxu0 0.0
  %172 = vmatpush1.msra.mxu0 %v38
  %173 = vmatprep.subr.mxu0 0.0
  %174 = vmatpush1.msra.mxu0 %v39
  %175 = vmatprep.subr.mxu0 0.0
  %176 = vmatpush1.msra.mxu0 %v40
  %177 = vmatprep.subr.mxu0 0.0
  %178 = vmatpush1.msra.mxu0 %v41
  %179 = vmatprep.subr.mxu0 0.0
  %180 = vmatpush1.msra.mxu0 0.0
  %181 = vmatprep.subr.mxu0 0.0
  %182 = vmatpush1.msra.mxu0 0.0
  %183 = vmatprep.subr.mxu0 0.0
  %184 = vmatpush1.msra.mxu0 0.0
  %185 = vmatprep.subr.mxu0 0.0
  %186 = vmatpush1.msra.mxu0 0.0
  %187 = vmatprep.subr.mxu0 0.0
  %188 = vmatpush1.msra.mxu0 0.0
  %189 = vmatprep.subr.mxu0 0.0
  %190 = vmatpush1.msra.mxu0 0.0
  %191 = vmatprep.subr.mxu0 0.0
  %192 = vmatpush1.msra.mxu0 0.0
  %193 = vmatprep.subr.mxu0 0.0
  %194 = vmatpush1.msra.mxu0 0.0
  %195 = vmatprep.subr.mxu0 0.0
  %196 = vmatpush1.msra.mxu0 0.0
  %197 = vmatprep.subr.mxu0 0.0
  %198 = vmatpush1.msra.mxu0 0.0
  %199 = vmatprep.subr.mxu0 0.0
  %200 = vmatpush1.msra.mxu0 0.0
  %201 = vmatprep.subr.mxu0 0.0
  %202 = vmatpush1.msra.mxu0 0.0
  %203 = vmatprep.subr.mxu0 0.0
  %204 = vmatpush1.msra.mxu0 0.0
  %205 = vmatprep.subr.mxu0 0.0
  %206 = vmatpush1.msra.mxu0 0.0
  %207 = vmatprep.subr.mxu0 0.0
  %208 = vmatpush1.msra.mxu0 0.0
  %209 = vmatprep.subr.mxu0 0.0
  %210 = vmatpush1.msra.mxu0 0.0
  %211 = vmatprep.subr.mxu0 0.0
  %212 = vmatpush1.msra.mxu0 0.0
  %213 = vmatprep.subr.mxu0 0.0
  %214 = vmatpush1.msra.mxu0 0.0
  %215 = vmatprep.subr.mxu0 0.0
  %216 = vmatpush1.msra.mxu0 0.0
  %217 = vmatprep.subr.mxu0 0.0
  %218 = vmatpush1.msra.mxu0 0.0
  %219 = vmatprep.subr.mxu0 0.0
  %220 = vmatpush1.msra.mxu0 0.0
  %221 = vmatprep.subr.mxu0 0.0
  %222 = vmatpush1.msra.mxu0 0.0
  %223 = vmatprep.mubr.f32.mxu0 0.0
  %224 = vmatmul.mubr.f32.gmra.mrb[0].mxu0 %v157
  %v225 = vpop.f32.mrb[0].mxu0
  %v226 = vadd.f32 %v153, %v225
  %v227 = vpop.f32.mrb[0].mxu0
  %228 = vdwg.mxu0
  %vm229 = vcmp.ge.f32.partialorder %v226, 0.0
  %230 = vset.pattern.permute.xlu0 3
  %231 = vperm.xlu0 %230, %v43
  %v232 = vpop.permute.xlu0 %231
  %v234 = vmul.f32 %v232, %v226
  %v235 = vsel %vm229, %v226, %v234
  %v237 = vlaneseq
  %v238 = vshrl.u32 %v237, 7
  %v239 = vsub.s32 0, %v238
  %v240 = vrot.slane %v42, %v239
  %v242 = vmul.f32 %v235, %v240
  %244 = vrot.lane.b32.xlu0 %v242, 4
  %v245 = vpop.permute.xlu0 %244
  %vm247 = vcmask 684064
  %248 = vst.msk [vmem:[#allocation3] sm:$0x1f] %vm247, %v245
  %v249 = vld [vmem:[#allocation3] sm:$0x1f]
  %v251 = vrot.slane %v249, 3
  %252 = vrot.lane.b32.xlu0 %v251, 124
  %v253 = vpop.permute.xlu0 %252
  %v255 = vrot.slane %v249, 6
  %256 = vrot.lane.b32.xlu0 %v255, 120
  %v257 = vpop.permute.xlu0 %256
  %vm259 = vcmask 1044480
  %v260 = vsel %vm259, %v249, %v253
  %v261 = vsel %vm77, %v253, %v257
  %262 = vset.pattern.permute.xlu0 2
  %263 = vperm.xlu0 %262, %v43
  %v264 = vpop.permute.xlu0 %263
  %vm266 = vcmask 121856
  %v268 = vsel %vm266, %v67, 0
  %vm270 = vcmask 1046528
  %v272 = vsel %vm270, %v261, 0
  %274 = vmatprep.subr.mxu0 0.0
  %275 = vmatpush1.msra.mxu0 %v260
  %276 = vmatprep.subr.mxu0 0.0
  %277 = vmatpush1.msra.mxu0 %v272
  %278 = vmatprep.subr.mxu0 0.0
  %279 = vmatpush1.msra.mxu0 0.0
  %280 = vmatprep.subr.mxu0 0.0
  %281 = vmatpush1.msra.mxu0 0.0
  %282 = vmatprep.subr.mxu0 0.0
  %283 = vmatpush1.msra.mxu0 0.0
  %284 = vmatprep.subr.mxu0 0.0
  %285 = vmatpush1.msra.mxu0 0.0
  %286 = vmatprep.subr.mxu0 0.0
  %287 = vmatpush1.msra.mxu0 0.0
  %288 = vmatprep.subr.mxu0 0.0
  %289 = vmatpush1.msra.mxu0 0.0
  %290 = vmatprep.subr.mxu0 0.0
  %291 = vmatpush1.msra.mxu0 0.0
  %292 = vmatprep.subr.mxu0 0.0
  %293 = vmatpush1.msra.mxu0 0.0
  %294 = vmatprep.subr.mxu0 0.0
  %295 = vmatpush1.msra.mxu0 0.0
  %296 = vmatprep.subr.mxu0 0.0
  %297 = vmatpush1.msra.mxu0 0.0
  %298 = vmatprep.subr.mxu0 0.0
  %299 = vmatpush1.msra.mxu0 0.0
  %300 = vmatprep.subr.mxu0 0.0
  %301 = vmatpush1.msra.mxu0 0.0
  %302 = vmatprep.subr.mxu0 0.0
  %303 = vmatpush1.msra.mxu0 0.0
  %304 = vmatprep.subr.mxu0 0.0
  %305 = vmatpush1.msra.mxu0 0.0
  %306 = vmatprep.subr.mxu0 0.0
  %307 = vmatpush1.msra.mxu0 0.0
  %308 = vmatprep.subr.mxu0 0.0
  %309 = vmatpush1.msra.mxu0 0.0
  %310 = vmatprep.subr.mxu0 0.0
  %311 = vmatpush1.msra.mxu0 0.0
  %312 = vmatprep.subr.mxu0 0.0
  %313 = vmatpush1.msra.mxu0 0.0
  %314 = vmatprep.subr.mxu0 0.0
  %315 = vmatpush1.msra.mxu0 0.0
  %316 = vmatprep.subr.mxu0 0.0
  %317 = vmatpush1.msra.mxu0 0.0
  %318 = vmatprep.subr.mxu0 0.0
  %319 = vmatpush1.msra.mxu0 0.0
  %320 = vmatprep.subr.mxu0 0.0
  %321 = vmatpush1.msra.mxu0 0.0
  %322 = vmatprep.subr.mxu0 0.0
  %323 = vmatpush1.msra.mxu0 0.0
  %324 = vmatprep.subr.mxu0 0.0
  %325 = vmatpush1.msra.mxu0 0.0
  %326 = vmatprep.subr.mxu0 0.0
  %327 = vmatpush1.msra.mxu0 0.0
  %328 = vmatprep.subr.mxu0 0.0
  %329 = vmatpush1.msra.mxu0 0.0
  %330 = vmatprep.subr.mxu0 0.0
  %331 = vmatpush1.msra.mxu0 0.0
  %332 = vmatprep.subr.mxu0 0.0
  %333 = vmatpush1.msra.mxu0 0.0
  %334 = vmatprep.subr.mxu0 0.0
  %335 = vmatpush1.msra.mxu0 0.0
  %336 = vmatprep.subr.mxu0 0.0
  %337 = vmatpush1.msra.mxu0 0.0
  %338 = vmatprep.mubr.f32.mxu0 0.0
  %339 = vmatmul.mubr.f32.gmra.mrb[0].mxu0 %v268
  %v340 = vpop.f32.mrb[0].mxu0
  %v341 = vadd.f32 %v264, %v340
  %v342 = vpop.f32.mrb[0].mxu0
  %343 = vdwg.mxu0
  %v344 = vld [vmem:[%s5] sm:$0x1f]
  %v346 = vsel %vm73, %v344, 0
  %348 = vmatprep.subr.mxu0 0.0
  %349 = vmatpush1.msra.mxu0 %v79
  %350 = vmatprep.subr.mxu0 0.0
  %351 = vmatpush1.msra.mxu0 0.0
  %352 = vmatprep.subr.mxu0 0.0
  %353 = vmatpush1.msra.mxu0 0.0
  %354 = vmatprep.subr.mxu0 0.0
  %355 = vmatpush1.msra.mxu0 0.0
  %356 = vmatprep.subr.mxu0 0.0
  %357 = vmatpush1.msra.mxu0 0.0
  %358 = vmatprep.subr.mxu0 0.0
  %359 = vmatpush1.msra.mxu0 0.0
  %360 = vmatprep.subr.mxu0 0.0
  %361 = vmatpush1.msra.mxu0 0.0
  %362 = vmatprep.subr.mxu0 0.0
  %363 = vmatpush1.msra.mxu0 0.0
  %364 = vmatprep.subr.mxu0 0.0
  %365 = vmatpush1.msra.mxu0 0.0
  %366 = vmatprep.subr.mxu0 0.0
  %367 = vmatpush1.msra.mxu0 0.0
  %368 = vmatprep.subr.mxu0 0.0
  %369 = vmatpush1.msra.mxu0 0.0
  %370 = vmatprep.subr.mxu0 0.0
  %371 = vmatpush1.msra.mxu0 0.0
  %372 = vmatprep.subr.mxu0 0.0
  %373 = vmatpush1.msra.mxu0 0.0
  %374 = vmatprep.subr.mxu0 0.0
  %375 = vmatpush1.msra.mxu0 0.0
  %376 = vmatprep.subr.mxu0 0.0
  %377 = vmatpush1.msra.mxu0 0.0
  %378 = vmatprep.subr.mxu0 0.0
  %379 = vmatpush1.msra.mxu0 0.0
  %380 = vmatprep.subr.mxu0 0.0
  %381 = vmatpush1.msra.mxu0 0.0
  %382 = vmatprep.subr.mxu0 0.0
  %383 = vmatpush1.msra.mxu0 0.0
  %384 = vmatprep.subr.mxu0 0.0
  %385 = vmatpush1.msra.mxu0 0.0
  %386 = vmatprep.subr.mxu0 0.0
  %387 = vmatpush1.msra.mxu0 0.0
  %388 = vmatprep.subr.mxu0 0.0
  %389 = vmatpush1.msra.mxu0 0.0
  %390 = vmatprep.subr.mxu0 0.0
  %391 = vmatpush1.msra.mxu0 0.0
  %392 = vmatprep.subr.mxu0 0.0
  %393 = vmatpush1.msra.mxu0 0.0
  %394 = vmatprep.subr.mxu0 0.0
  %395 = vmatpush1.msra.mxu0 0.0
  %396 = vmatprep.subr.mxu0 0.0
  %397 = vmatpush1.msra.mxu0 0.0
  %398 = vmatprep.subr.mxu0 0.0
  %399 = vmatpush1.msra.mxu0 0.0
  %400 = vmatprep.subr.mxu0 0.0
  %401 = vmatpush1.msra.mxu0 0.0
  %402 = vmatprep.subr.mxu0 0.0
  %403 = vmatpush1.msra.mxu0 0.0
  %404 = vmatprep.subr.mxu0 0.0
  %405 = vmatpush1.msra.mxu0 0.0
  %406 = vmatprep.subr.mxu0 0.0
  %407 = vmatpush1.msra.mxu0 0.0
  %408 = vmatprep.subr.mxu0 0.0
  %409 = vmatpush1.msra.mxu0 0.0
  %410 = vmatprep.subr.mxu0 0.0
  %411 = vmatpush1.msra.mxu0 0.0
  %412 = vmatprep.mubr.f32.mxu0 0.0
  %413 = vmatmul.mubr.f32.gmra.mrb[0].mxu0 %v346
  %v414 = vpop.f32.mrb[0].mxu0
  %v415 = vadd.f32 0.0, %v414
  %v416 = vpop.f32.mrb[0].mxu0
  %417 = vdwg.mxu0
  %v418 = vadd.f32 %v341, %v415
  %419 = vset.pattern.permute.xlu0 5
  %420 = vperm.xlu0 %419, %v43
  %v421 = vpop.permute.xlu0 %420
  %v423 = vadd.f32 %v418, %v421
  %vm424 = vcmp.ge.f32.partialorder %v423, 0.0
  %425 = vset.pattern.permute.xlu0 4
  %426 = vperm.xlu0 %425, %v43
  %v427 = vpop.permute.xlu0 %426
  %v429 = vmul.f32 %v427, %v423
  %v430 = vsel %vm424, %v423, %v429
  %v431 = vld [vmem:[%s6] sm:$0x1f]
  %v432 = vld [vmem:[%s7] sm:$0x1f]
  %433 = vset.pattern.permute.xlu0 6
  %434 = vperm.xlu0 %433, %v43
  %v435 = vpop.permute.xlu0 %434
  %vm437 = vcmask 39936
  %v439 = vsel %vm437, %v431, 0
  %v442 = vsel %vm259, %v430, 0
  %444 = vmatprep.subr.mxu0 0.0
  %445 = vmatpush1.msra.mxu0 %v442
  %446 = vmatprep.subr.mxu0 0.0
  %447 = vmatpush1.msra.mxu0 0.0
  %448 = vmatprep.subr.mxu0 0.0
  %449 = vmatpush1.msra.mxu0 0.0
  %450 = vmatprep.subr.mxu0 0.0
  %451 = vmatpush1.msra.mxu0 0.0
  %452 = vmatprep.subr.mxu0 0.0
  %453 = vmatpush1.msra.mxu0 0.0
  %454 = vmatprep.subr.mxu0 0.0
  %455 = vmatpush1.msra.mxu0 0.0
  %456 = vmatprep.subr.mxu0 0.0
  %457 = vmatpush1.msra.mxu0 0.0
  %458 = vmatprep.subr.mxu0 0.0
  %459 = vmatpush1.msra.mxu0 0.0
  %460 = vmatprep.subr.mxu0 0.0
  %461 = vmatpush1.msra.mxu0 0.0
  %462 = vmatprep.subr.mxu0 0.0
  %463 = vmatpush1.msra.mxu0 0.0
  %464 = vmatprep.subr.mxu0 0.0
  %465 = vmatpush1.msra.mxu0 0.0
  %466 = vmatprep.subr.mxu0 0.0
  %467 = vmatpush1.msra.mxu0 0.0
  %468 = vmatprep.subr.mxu0 0.0
  %469 = vmatpush1.msra.mxu0 0.0
  %470 = vmatprep.subr.mxu0 0.0
  %471 = vmatpush1.msra.mxu0 0.0
  %472 = vmatprep.subr.mxu0 0.0
  %473 = vmatpush1.msra.mxu0 0.0
  %474 = vmatprep.subr.mxu0 0.0
  %475 = vmatpush1.msra.mxu0 0.0
  %476 = vmatprep.subr.mxu0 0.0
  %477 = vmatpush1.msra.mxu0 0.0
  %478 = vmatprep.subr.mxu0 0.0
  %479 = vmatpush1.msra.mxu0 0.0
  %480 = vmatprep.subr.mxu0 0.0
  %481 = vmatpush1.msra.mxu0 0.0
  %482 = vmatprep.subr.mxu0 0.0
  %483 = vmatpush1.msra.mxu0 0.0
  %484 = vmatprep.subr.mxu0 0.0
  %485 = vmatpush1.msra.mxu0 0.0
  %486 = vmatprep.subr.mxu0 0.0
  %487 = vmatpush1.msra.mxu0 0.0
  %488 = vmatprep.subr.mxu0 0.0
  %489 = vmatpush1.msra.mxu0 0.0
  %490 = vmatprep.subr.mxu0 0.0
  %491 = vmatpush1.msra.mxu0 0.0
  %492 = vmatprep.subr.mxu0 0.0
  %493 = vmatpush1.msra.mxu0 0.0
  %494 = vmatprep.subr.mxu0 0.0
  %495 = vmatpush1.msra.mxu0 0.0
  %496 = vmatprep.subr.mxu0 0.0
  %497 = vmatpush1.msra.mxu0 0.0
  %498 = vmatprep.subr.mxu0 0.0
  %499 = vmatpush1.msra.mxu0 0.0
  %500 = vmatprep.subr.mxu0 0.0
  %501 = vmatpush1.msra.mxu0 0.0
  %502 = vmatprep.subr.mxu0 0.0
  %503 = vmatpush1.msra.mxu0 0.0
  %504 = vmatprep.subr.mxu0 0.0
  %505 = vmatpush1.msra.mxu0 0.0
  %506 = vmatprep.subr.mxu0 0.0
  %507 = vmatpush1.msra.mxu0 0.0
  %508 = vmatprep.mubr.f32.mxu0 0.0
  %509 = vmatmul.mubr.f32.gmra.mrb[0].mxu0 %v439
  %v510 = vpop.f32.mrb[0].mxu0
  %v511 = vadd.f32 %v435, %v510
  %v512 = vpop.f32.mrb[0].mxu0
  %513 = vdwg.mxu0
  %514 = vset.pattern.permute.xlu0 7
  %515 = vperm.xlu0 %514, %v43
  %v516 = vpop.permute.xlu0 %515
  %v519 = vsel %vm155, %v511, 0
  %521 = vmatprep.subr.mxu0 0.0
  %522 = vmatpush1.msra.mxu0 %v32
  %523 = vmatprep.subr.mxu0 0.0
  %524 = vmatpush1.msra.mxu0 %v33
  %525 = vmatprep.subr.mxu0 0.0
  %526 = vmatpush1.msra.mxu0 %v34
  %527 = vmatprep.subr.mxu0 0.0
  %528 = vmatpush1.msra.mxu0 %v35
  %529 = vmatprep.subr.mxu0 0.0
  %530 = vmatpush1.msra.mxu0 %v36
  %531 = vmatprep.subr.mxu0 0.0
  %532 = vmatpush1.msra.mxu0 %v37
  %533 = vmatprep.subr.mxu0 0.0
  %534 = vmatpush1.msra.mxu0 %v38
  %535 = vmatprep.subr.mxu0 0.0
  %536 = vmatpush1.msra.mxu0 %v39
  %537 = vmatprep.subr.mxu0 0.0
  %538 = vmatpush1.msra.mxu0 %v40
  %539 = vmatprep.subr.mxu0 0.0
  %540 = vmatpush1.msra.mxu0 %v41
  %541 = vmatprep.subr.mxu0 0.0
  %542 = vmatpush1.msra.mxu0 0.0
  %543 = vmatprep.subr.mxu0 0.0
  %544 = vmatpush1.msra.mxu0 0.0
  %545 = vmatprep.subr.mxu0 0.0
  %546 = vmatpush1.msra.mxu0 0.0
  %547 = vmatprep.subr.mxu0 0.0
  %548 = vmatpush1.msra.mxu0 0.0
  %549 = vmatprep.subr.mxu0 0.0
  %550 = vmatpush1.msra.mxu0 0.0
  %551 = vmatprep.subr.mxu0 0.0
  %552 = vmatpush1.msra.mxu0 0.0
  %553 = vmatprep.subr.mxu0 0.0
  %554 = vmatpush1.msra.mxu0 0.0
  %555 = vmatprep.subr.mxu0 0.0
  %556 = vmatpush1.msra.mxu0 0.0
  %557 = vmatprep.subr.mxu0 0.0
  %558 = vmatpush1.msra.mxu0 0.0
  %559 = vmatprep.subr.mxu0 0.0
  %560 = vmatpush1.msra.mxu0 0.0
  %561 = vmatprep.subr.mxu0 0.0
  %562 = vmatpush1.msra.mxu0 0.0
  %563 = vmatprep.subr.mxu0 0.0
  %564 = vmatpush1.msra.mxu0 0.0
  %565 = vmatprep.subr.mxu0 0.0
  %566 = vmatpush1.msra.mxu0 0.0
  %567 = vmatprep.subr.mxu0 0.0
  %568 = vmatpush1.msra.mxu0 0.0
  %569 = vmatprep.subr.mxu0 0.0
  %570 = vmatpush1.msra.mxu0 0.0
  %571 = vmatprep.subr.mxu0 0.0
  %572 = vmatpush1.msra.mxu0 0.0
  %573 = vmatprep.subr.mxu0 0.0
  %574 = vmatpush1.msra.mxu0 0.0
  %575 = vmatprep.subr.mxu0 0.0
  %576 = vmatpush1.msra.mxu0 0.0
  %577 = vmatprep.subr.mxu0 0.0
  %578 = vmatpush1.msra.mxu0 0.0
  %579 = vmatprep.subr.mxu0 0.0
  %580 = vmatpush1.msra.mxu0 0.0
  %581 = vmatprep.subr.mxu0 0.0
  %582 = vmatpush1.msra.mxu0 0.0
  %583 = vmatprep.subr.mxu0 0.0
  %584 = vmatpush1.msra.mxu0 0.0
  %585 = vmatprep.mubr.f32.mxu0 0.0
  %586 = vmatmul.mubr.f32.gmra.mrb[0].mxu0 %v519
  %v587 = vpop.f32.mrb[0].mxu0
  %v588 = vadd.f32 %v516, %v587
  %v589 = vpop.f32.mrb[0].mxu0
  %590 = vdwg.mxu0
  %vm591 = vcmp.ge.f32.partialorder %v588, 0.0
  %592 = vset.pattern.permute.xlu0 9
  %593 = vperm.xlu0 %592, %v43
  %v594 = vpop.permute.xlu0 %593
  %v596 = vmul.f32 %v594, %v588
  %v597 = vsel %vm591, %v588, %v596
  %v598 = vmul.f32 %v597, %v240
  %600 = vrot.lane.b32.xlu0 %v598, 4
  %v601 = vpop.permute.xlu0 %600
  %603 = vst.msk [vmem:[#allocation3] sm:$0x1f] %vm247, %v601
  %v604 = vld [vmem:[#allocation3] sm:$0x1f]
  %v606 = vrot.slane %v604, 3
  %607 = vrot.lane.b32.xlu0 %v606, 124
  %v608 = vpop.permute.xlu0 %607
  %v610 = vrot.slane %v604, 6
  %611 = vrot.lane.b32.xlu0 %v610, 120
  %v612 = vpop.permute.xlu0 %611
  %v614 = vsel %vm259, %v604, %v608
  %v615 = vsel %vm77, %v608, %v612
  %616 = vset.pattern.permute.xlu0 8
  %617 = vperm.xlu0 %616, %v43
  %v618 = vpop.permute.xlu0 %617
  %v621 = vsel %vm266, %v432, 0
  %v624 = vsel %vm270, %v615, 0
  %626 = vmatprep.subr.mxu0 0.0
  %627 = vmatpush1.msra.mxu0 %v614
  %628 = vmatprep.subr.mxu0 0.0
  %629 = vmatpush1.msra.mxu0 %v624
  %630 = vmatprep.subr.mxu0 0.0
  %631 = vmatpush1.msra.mxu0 0.0
  %632 = vmatprep.subr.mxu0 0.0
  %633 = vmatpush1.msra.mxu0 0.0
  %634 = vmatprep.subr.mxu0 0.0
  %635 = vmatpush1.msra.mxu0 0.0
  %636 = vmatprep.subr.mxu0 0.0
  %637 = vmatpush1.msra.mxu0 0.0
  %638 = vmatprep.subr.mxu0 0.0
  %639 = vmatpush1.msra.mxu0 0.0
  %640 = vmatprep.subr.mxu0 0.0
  %641 = vmatpush1.msra.mxu0 0.0
  %642 = vmatprep.subr.mxu0 0.0
  %643 = vmatpush1.msra.mxu0 0.0
  %644 = vmatprep.subr.mxu0 0.0
  %645 = vmatpush1.msra.mxu0 0.0
  %646 = vmatprep.subr.mxu0 0.0
  %647 = vmatpush1.msra.mxu0 0.0
  %648 = vmatprep.subr.mxu0 0.0
  %649 = vmatpush1.msra.mxu0 0.0
  %650 = vmatprep.subr.mxu0 0.0
  %651 = vmatpush1.msra.mxu0 0.0
  %652 = vmatprep.subr.mxu0 0.0
  %653 = vmatpush1.msra.mxu0 0.0
  %654 = vmatprep.subr.mxu0 0.0
  %655 = vmatpush1.msra.mxu0 0.0
  %656 = vmatprep.subr.mxu0 0.0
  %657 = vmatpush1.msra.mxu0 0.0
  %658 = vmatprep.subr.mxu0 0.0
  %659 = vmatpush1.msra.mxu0 0.0
  %660 = vmatprep.subr.mxu0 0.0
  %661 = vmatpush1.msra.mxu0 0.0
  %662 = vmatprep.subr.mxu0 0.0
  %663 = vmatpush1.msra.mxu0 0.0
  %664 = vmatprep.subr.mxu0 0.0
  %665 = vmatpush1.msra.mxu0 0.0
  %666 = vmatprep.subr.mxu0 0.0
  %667 = vmatpush1.msra.mxu0 0.0
  %668 = vmatprep.subr.mxu0 0.0
  %669 = vmatpush1.msra.mxu0 0.0
  %670 = vmatprep.subr.mxu0 0.0
  %671 = vmatpush1.msra.mxu0 0.0
  %672 = vmatprep.subr.mxu0 0.0
  %673 = vmatpush1.msra.mxu0 0.0
  %674 = vmatprep.subr.mxu0 0.0
  %675 = vmatpush1.msra.mxu0 0.0
  %676 = vmatprep.subr.mxu0 0.0
  %677 = vmatpush1.msra.mxu0 0.0
  %678 = vmatprep.subr.mxu0 0.0
  %679 = vmatpush1.msra.mxu0 0.0
  %680 = vmatprep.subr.mxu0 0.0
  %681 = vmatpush1.msra.mxu0 0.0
  %682 = vmatprep.subr.mxu0 0.0
  %683 = vmatpush1.msra.mxu0 0.0
  %684 = vmatprep.subr.mxu0 0.0
  %685 = vmatpush1.msra.mxu0 0.0
  %686 = vmatprep.subr.mxu0 0.0
  %687 = vmatpush1.msra.mxu0 0.0
  %688 = vmatprep.subr.mxu0 0.0
  %689 = vmatpush1.msra.mxu0 0.0
  %690 = vmatprep.mubr.f32.mxu0 0.0
  %691 = vmatmul.mubr.f32.gmra.mrb[0].mxu0 %v621
  %v692 = vpop.f32.mrb[0].mxu0
  %v693 = vadd.f32 %v618, %v692
  %v694 = vpop.f32.mrb[0].mxu0
  %695 = vdwg.mxu0
  %v696 = vadd.f32 %v693, %v430
  %vm697 = vcmp.ge.f32.partialorder %v696, 0.0
  %698 = vset.pattern.permute.xlu0 10
  %699 = vperm.xlu0 %698, %v43
  %v700 = vpop.permute.xlu0 %699
  %v702 = vmul.f32 %v700, %v696
  %v703 = vsel %vm697, %v696, %v702
  %705 = vrot.lane.b32.xlu0 %v703, 124
  %v706 = vpop.permute.xlu0 %705
  %vm708 = vcmask 258048
  %709 = vst.msk [vmem:[%s9] sm:$0x1f] %vm708, %v706
  %710 = vrot.lane.b32.xlu0 %v703, 84
  %v711 = vpop.permute.xlu0 %710
  %s713 = scalar_lea.vmem %s9, 8
  %714 = vst.msk [vmem:[%s713] sm:$0x1f] %vm708, %v711
  // Predicated region
  $region38: #{social_stgcnn_forward.2} parent=0 // pred_check
    _
  $region39: #{social_stgcnn_forward.2} parent=0 // pred_check_branch
    %716 = sbr.rel (0) target = $region41
  $region40: #{social_stgcnn_forward.2} parent=0 // pred_region
    _
  $region41: #{social_stgcnn_forward.2} parent=0 // pred_fallthru
    _
  // Predicated region
  $region42: #{social_stgcnn_forward.2} parent=0 // pred_check
    _
  $region43: #{social_stgcnn_forward.2} parent=0 // pred_check_branch
    %718 = sbr.rel (0) target = $region45
  $region44: #{social_stgcnn_forward.2} parent=0 // pred_region
    _
  $region45: #{social_stgcnn_forward.2} parent=0 // pred_fallthru
    _

</llo_original>
